<compile_context>
chip_gen: v6e
topology: v6e:2x2x1
jax: 0.10.0
libtpu: 0.0.40
codegen_flags: <defaults>
</compile_context>

<pallas_src>
import functools

import jax
import jax.numpy as jnp
from jax.experimental import pallas as pl
from jax.experimental.pallas import tpu as pltpu


def _round_up(x, m):
    return (x + m - 1) // m * m


def _im2col_rows(x_cm, h_idx, w_idx, *, H, W, K):
    """Build the im2col patch matrix [K*K*Cp, M] from a channel-major slab.

    x_cm:   [Cp, M]  with m = n*H*W + h*W + w and Cp a multiple of 8.
    h_idx:  [1, M]   int32, h coordinate per flattened position.
    w_idx:  [1, M]   int32, w coordinate per flattened position.

    Tap (kh, kw) is realised as a full-lane roll of the flattened slab (XLU) plus
    a boundary mask (VPU select) that zeroes positions whose shifted (h, w) falls
    outside the image (this also kills the row/batch wrap-around of the roll).
    """
    P = K // 2
    M = x_cm.shape[1]
    pieces = []
    for kh in range(K):
        for kw in range(K):
            dh, dw = kh - P, kw - P
            d = dh * W + dw                      # flattened tap offset
            if d == 0 and dh == 0 and dw == 0:
                pieces.append(x_cm)
                continue
            shifted = pltpu.roll(x_cm, (-d) % M, axis=1)   # out[m] = x[m + d]
            hv = h_idx + dh
            wv = w_idx + dw
            valid = (hv >= 0) & (hv < H) & (wv >= 0) & (wv < W)   # [1, M]
            pieces.append(jnp.where(valid, shifted, 0.0))
    # Every piece has Cp (multiple of 8) sublanes -> tile-aligned concat.
    return jnp.concatenate(pieces, axis=0)       # [K*K*Cp, M]


def edsr_resblock_kernel(x_ref, w1_ref, b1_ref, w2_ref, gamma_ref, beta_ref,
                         hidx_ref, widx_ref, out_ref, *, H, W, K1, K2, eps, skip):
    """conv -> ReLU -> conv -> BatchNorm (batch stats) -> skip, fully in VMEM."""
    M = x_ref.shape[1]
    Cout = out_ref.shape[0]

    xp = x_ref[...].astype(jnp.float32)          # [Cin_p, M], lane-dense
    h_idx = hidx_ref[...]                        # [1, M] int32
    w_idx = widx_ref[...]                        # [1, M] int32

    # ---- conv1: one im2col matmul (contraction K1*K1*Cin_p) + bias + ReLU ----
    patches1 = _im2col_rows(xp, h_idx, w_idx, H=H, W=W, K=K1)      # [K1*K1*Cin_p, M]
    a1 = jnp.dot(w1_ref[...], patches1, preferred_element_type=jnp.float32)
    a1 = jnp.maximum(a1 + b1_ref[...], 0.0)                         # [Cmid_p, M]

    # ---- conv2: one im2col matmul (bias omitted: it cancels under batch-stat BN) ----
    patches2 = _im2col_rows(a1, h_idx, w_idx, H=H, W=W, K=K2)       # [K2*K2*Cmid_p, M]
    y2 = jnp.dot(w2_ref[...], patches2, preferred_element_type=jnp.float32)  # [Cout, M]

    # ---- BatchNorm2d (training-mode forward), one-pass batch statistics ----
    inv_m = 1.0 / M
    s1 = jnp.sum(y2, axis=1, keepdims=True)                         # [Cout, 1]
    s2 = jnp.sum(y2 * y2, axis=1, keepdims=True)                    # [Cout, 1]
    mean = s1 * inv_m
    var = s2 * inv_m - mean * mean                                  # biased variance
    scale = jax.lax.rsqrt(var + eps) * gamma_ref[...]
    y_bn = (y2 - mean) * scale + beta_ref[...]

    # ---- skip connection (requires Cin == Cout; checked in the wrapper) ----
    if skip:
        y_bn = y_bn + xp[:Cout, :]

    out_ref[...] = y_bn.astype(out_ref.dtype)    # [Cout, M]: 512 dense lanes


def edsr_resblock(x_nchw, w1, b1, w2, b2, gamma, beta, *, eps=1e-5, skip=True):
    """Wrapper: NCHW in / NCHW out. w1, w2 are HWIO ([K, K, Cin, Cout])."""
    del b2  # cancels exactly in training-mode BatchNorm (batch statistics)

    N, Cin, H, W = x_nchw.shape
    K1, _, _, Cmid = w1.shape
    K2, _, _, Cout = w2.shape
    if skip:
        assert Cin == Cout, "skip connection requires Cin == Cout"
    M = N * H * W
    Cin_p = _round_up(Cin, 8)       # pad channels to the f32 sublane tile
    Cmid_p = _round_up(Cmid, 8)

    # Channel-major, lane-dense layout: [C, N*H*W] (cheap major-dim transpose,
    # no spatial padding / no extra padded HBM copy).
    x_cm = jnp.transpose(x_nchw, (1, 0, 2, 3)).reshape(Cin, M)
    x_cm = jnp.pad(x_cm, ((0, Cin_p - Cin), (0, 0)))

    # Weights reshaped to [C_out_layer, K*K*C_in_pad], matching patch row order
    # (tap-major, channel-minor); padded channel columns are zero.
    w1_t = jnp.pad(jnp.transpose(w1, (3, 0, 1, 2)),
                   ((0, Cmid_p - Cmid), (0, 0), (0, 0), (0, Cin_p - Cin)))
    w1_full = w1_t.reshape(Cmid_p, K1 * K1 * Cin_p)
    b1_full = jnp.pad(b1, (0, Cmid_p - Cmid)).reshape(Cmid_p, 1)

    w2_t = jnp.pad(jnp.transpose(w2, (3, 0, 1, 2)),
                   ((0, 0), (0, 0), (0, 0), (0, Cmid_p - Cmid)))
    w2_full = w2_t.reshape(Cout, K2 * K2 * Cmid_p)

    gamma_c = gamma.reshape(Cout, 1)
    beta_c = beta.reshape(Cout, 1)

    # Per-position (h, w) coordinates for boundary masking of the rolled taps.
    m_idx = jnp.arange(M, dtype=jnp.int32).reshape(1, M)
    w_idx = m_idx % W
    h_idx = (m_idx // W) % H

    kernel = functools.partial(edsr_resblock_kernel, H=H, W=W, K1=K1, K2=K2,
                               eps=eps, skip=skip)

    out_cm = pl.pallas_call(
        kernel,
        out_shape=jax.ShapeDtypeStruct((Cout, M), x_nchw.dtype),
        grid=(1,),
        in_specs=[
            pl.BlockSpec((Cin_p, M), lambda i: (0, 0)),
            pl.BlockSpec((Cmid_p, K1 * K1 * Cin_p), lambda i: (0, 0)),
            pl.BlockSpec((Cmid_p, 1), lambda i: (0, 0)),
            pl.BlockSpec((Cout, K2 * K2 * Cmid_p), lambda i: (0, 0)),
            pl.BlockSpec((Cout, 1), lambda i: (0, 0)),
            pl.BlockSpec((Cout, 1), lambda i: (0, 0)),
            pl.BlockSpec((1, M), lambda i: (0, 0)),
            pl.BlockSpec((1, M), lambda i: (0, 0)),
        ],
        out_specs=pl.BlockSpec((Cout, M), lambda i: (0, 0)),
        compiler_params=pltpu.CompilerParams(dimension_semantics=("arbitrary",)),
    )(x_cm, w1_full, b1_full, w2_full, gamma_c, beta_c, h_idx, w_idx)

    return jnp.transpose(out_cm.reshape(Cout, N, H, W), (1, 0, 2, 3))


def _reference(x_nchw, w1, b1, w2, b2, gamma, beta, *, eps=1e-5, skip=True):
    """Pure-JAX reference (NCHW, lax convs) mirroring the PyTorch module."""
    dn = jax.lax.conv_dimension_numbers(x_nchw.shape, (1, 1, 1, 1),
                                        ("NCHW", "HWIO", "NCHW"))
    y = jax.lax.conv_general_dilated(x_nchw, w1, (1, 1), "SAME",
                                     dimension_numbers=dn)
    y = y + b1[None, :, None, None]
    y = jnp.maximum(y, 0.0)
    y = jax.lax.conv_general_dilated(y, w2, (1, 1), "SAME",
                                     dimension_numbers=dn)
    y = y + b2[None, :, None, None]
    mean = jnp.mean(y, axis=(0, 2, 3), keepdims=True)
    var = jnp.mean((y - mean) ** 2, axis=(0, 2, 3), keepdims=True)
    y = (y - mean) * jax.lax.rsqrt(var + eps)
    y = y * gamma[None, :, None, None] + beta[None, :, None, None]
    return x_nchw + y if skip else y


if __name__ == "__main__":
    # Module config: in_channels=[4, 8], out_channels=[8, 4], kernel_size=[3, 3],
    # ReLU non-linearity, skip_connection=True.
    N, Cin, H, W = 2, 4, 16, 16
    Cmid, Cout = 8, 4
    K1 = K2 = 3

    key = jax.random.PRNGKey(0)
    kx, k1, k2, k3, k4, k5, k6 = jax.random.split(key, 7)

    x = jax.random.normal(kx, (N, Cin, H, W), dtype=jnp.float32)
    # Deterministic synthetic parameters (HWIO conv weights).
    w1 = 0.1 * jax.random.normal(k1, (K1, K1, Cin, Cmid), dtype=jnp.float32)
    b1 = 0.1 * jax.random.normal(k2, (Cmid,), dtype=jnp.float32)
    w2 = 0.1 * jax.random.normal(k3, (K2, K2, Cmid, Cout), dtype=jnp.float32)
    b2 = 0.1 * jax.random.normal(k4, (Cout,), dtype=jnp.float32)
    gamma = 1.0 + 0.1 * jax.random.normal(k5, (Cout,), dtype=jnp.float32)
    beta = 0.1 * jax.random.normal(k6, (Cout,), dtype=jnp.float32)

    out = edsr_resblock(x, w1, b1, w2, b2, gamma, beta, eps=1e-5, skip=True)
    out = jax.block_until_ready(out)

    ref = _reference(x, w1, b1, w2, b2, gamma, beta, eps=1e-5, skip=True)
    assert out.shape == (N, Cout, H, W)
    assert jnp.allclose(out, ref, atol=1e-4, rtol=1e-4), \
        f"max abs diff {jnp.max(jnp.abs(out - ref))}"

    print("KERNEL_OK")
</pallas_src>

<mosaic_0001>
module attributes {stable_mosaic.version = 11 : i64} {
  func.func @edsr_resblock_kernel(%arg0: i32, %arg1: memref<8x512xf32, #tpu.memory_space<vmem>>, %arg2: memref<8x72xf32, #tpu.memory_space<vmem>>, %arg3: memref<8x1xf32, #tpu.memory_space<vmem>>, %arg4: memref<4x72xf32, #tpu.memory_space<vmem>>, %arg5: memref<4x1xf32, #tpu.memory_space<vmem>>, %arg6: memref<4x1xf32, #tpu.memory_space<vmem>>, %arg7: memref<1x512xi32, #tpu.memory_space<vmem>>, %arg8: memref<1x512xi32, #tpu.memory_space<vmem>>, %arg9: memref<4x512xf32, #tpu.memory_space<vmem>>) attributes {dimension_semantics = [#tpu.dimension_semantics<arbitrary>], iteration_bounds = array<i64: 1>, scalar_prefetch = 0 : i64, scratch_operands = 0 : i64, tpu.core_type = #tpu.core_type<tc>, window_params = [{pipeline_mode = #tpu.pipeline_mode<synchronous>, transform_indices = @transform_0, window_bounds = array<i64: 8, 512>}, {pipeline_mode = #tpu.pipeline_mode<synchronous>, transform_indices = @transform_1, window_bounds = array<i64: 8, 72>}, {pipeline_mode = #tpu.pipeline_mode<synchronous>, transform_indices = @transform_2, window_bounds = array<i64: 8, 1>}, {pipeline_mode = #tpu.pipeline_mode<synchronous>, transform_indices = @transform_3, window_bounds = array<i64: 4, 72>}, {pipeline_mode = #tpu.pipeline_mode<synchronous>, transform_indices = @transform_4, window_bounds = array<i64: 4, 1>}, {pipeline_mode = #tpu.pipeline_mode<synchronous>, transform_indices = @transform_5, window_bounds = array<i64: 4, 1>}, {pipeline_mode = #tpu.pipeline_mode<synchronous>, transform_indices = @transform_6, window_bounds = array<i64: 1, 512>}, {pipeline_mode = #tpu.pipeline_mode<synchronous>, transform_indices = @transform_7, window_bounds = array<i64: 1, 512>}, {pipeline_mode = #tpu.pipeline_mode<synchronous>, transform_indices = @transform_8, window_bounds = array<i64: 4, 512>}]} {
    %c0 = arith.constant 0 : index
    %c0_0 = arith.constant 0 : index
    %0 = vector.load %arg1[%c0, %c0_0] : memref<8x512xf32, #tpu.memory_space<vmem>>, vector<8x512xf32>
    %c0_1 = arith.constant 0 : index
    %c0_2 = arith.constant 0 : index
    %1 = vector.load %arg7[%c0_1, %c0_2] : memref<1x512xi32, #tpu.memory_space<vmem>>, vector<1x512xi32>
    %c0_3 = arith.constant 0 : index
    %c0_4 = arith.constant 0 : index
    %2 = vector.load %arg8[%c0_3, %c0_4] : memref<1x512xi32, #tpu.memory_space<vmem>>, vector<1x512xi32>
    %c17_i32 = arith.constant 17 : i32
    %3 = tpu.dynamic_rotate %0 by %c17_i32 dim 1 : vector<8x512xf32>, i32 -> vector<8x512xf32>
    %c-1_i32 = arith.constant -1 : i32
    %4 = vector.broadcast %c-1_i32 : i32 to vector<1x512xi32>
    %5 = arith.addi %1, %4 : vector<1x512xi32>
    %c-1_i32_5 = arith.constant -1 : i32
    %6 = vector.broadcast %c-1_i32_5 : i32 to vector<1x512xi32>
    %7 = arith.addi %2, %6 : vector<1x512xi32>
    %c0_i32 = arith.constant 0 : i32
    %8 = vector.broadcast %c0_i32 : i32 to vector<1x512xi32>
    %9 = arith.cmpi sge, %5, %8 : vector<1x512xi32>
    %c16_i32 = arith.constant 16 : i32
    %10 = vector.broadcast %c16_i32 : i32 to vector<1x512xi32>
    %11 = arith.cmpi slt, %5, %10 : vector<1x512xi32>
    %12 = arith.andi %9, %11 : vector<1x512xi1>
    %c0_i32_6 = arith.constant 0 : i32
    %13 = vector.broadcast %c0_i32_6 : i32 to vector<1x512xi32>
    %14 = arith.cmpi sge, %7, %13 : vector<1x512xi32>
    %15 = arith.andi %12, %14 : vector<1x512xi1>
    %c16_i32_7 = arith.constant 16 : i32
    %16 = vector.broadcast %c16_i32_7 : i32 to vector<1x512xi32>
    %17 = arith.cmpi slt, %7, %16 : vector<1x512xi32>
    %18 = arith.andi %15, %17 : vector<1x512xi1>
    %cst = arith.constant 0.000000e+00 : f32
    %19 = vector.shape_cast %18 : vector<1x512xi1> to vector<1x512xi1>
    %20 = vector.broadcast %19 : vector<1x512xi1> to vector<8x512xi1>
    %21 = vector.broadcast %cst : f32 to vector<8x512xf32>
    %22 = arith.select %20, %3, %21 : vector<8x512xi1>, vector<8x512xf32>
    %c16_i32_8 = arith.constant 16 : i32
    %23 = tpu.dynamic_rotate %0 by %c16_i32_8 dim 1 : vector<8x512xf32>, i32 -> vector<8x512xf32>
    %c-1_i32_9 = arith.constant -1 : i32
    %24 = vector.broadcast %c-1_i32_9 : i32 to vector<1x512xi32>
    %25 = arith.addi %1, %24 : vector<1x512xi32>
    %c0_i32_10 = arith.constant 0 : i32
    %26 = vector.broadcast %c0_i32_10 : i32 to vector<1x512xi32>
    %27 = arith.addi %2, %26 : vector<1x512xi32>
    %c0_i32_11 = arith.constant 0 : i32
    %28 = vector.broadcast %c0_i32_11 : i32 to vector<1x512xi32>
    %29 = arith.cmpi sge, %25, %28 : vector<1x512xi32>
    %c16_i32_12 = arith.constant 16 : i32
    %30 = vector.broadcast %c16_i32_12 : i32 to vector<1x512xi32>
    %31 = arith.cmpi slt, %25, %30 : vector<1x512xi32>
    %32 = arith.andi %29, %31 : vector<1x512xi1>
    %c0_i32_13 = arith.constant 0 : i32
    %33 = vector.broadcast %c0_i32_13 : i32 to vector<1x512xi32>
    %34 = arith.cmpi sge, %27, %33 : vector<1x512xi32>
    %35 = arith.andi %32, %34 : vector<1x512xi1>
    %c16_i32_14 = arith.constant 16 : i32
    %36 = vector.broadcast %c16_i32_14 : i32 to vector<1x512xi32>
    %37 = arith.cmpi slt, %27, %36 : vector<1x512xi32>
    %38 = arith.andi %35, %37 : vector<1x512xi1>
    %cst_15 = arith.constant 0.000000e+00 : f32
    %39 = vector.shape_cast %38 : vector<1x512xi1> to vector<1x512xi1>
    %40 = vector.broadcast %39 : vector<1x512xi1> to vector<8x512xi1>
    %41 = vector.broadcast %cst_15 : f32 to vector<8x512xf32>
    %42 = arith.select %40, %23, %41 : vector<8x512xi1>, vector<8x512xf32>
    %c15_i32 = arith.constant 15 : i32
    %43 = tpu.dynamic_rotate %0 by %c15_i32 dim 1 : vector<8x512xf32>, i32 -> vector<8x512xf32>
    %c-1_i32_16 = arith.constant -1 : i32
    %44 = vector.broadcast %c-1_i32_16 : i32 to vector<1x512xi32>
    %45 = arith.addi %1, %44 : vector<1x512xi32>
    %c1_i32 = arith.constant 1 : i32
    %46 = vector.broadcast %c1_i32 : i32 to vector<1x512xi32>
    %47 = arith.addi %2, %46 : vector<1x512xi32>
    %c0_i32_17 = arith.constant 0 : i32
    %48 = vector.broadcast %c0_i32_17 : i32 to vector<1x512xi32>
    %49 = arith.cmpi sge, %45, %48 : vector<1x512xi32>
    %c16_i32_18 = arith.constant 16 : i32
    %50 = vector.broadcast %c16_i32_18 : i32 to vector<1x512xi32>
    %51 = arith.cmpi slt, %45, %50 : vector<1x512xi32>
    %52 = arith.andi %49, %51 : vector<1x512xi1>
    %c0_i32_19 = arith.constant 0 : i32
    %53 = vector.broadcast %c0_i32_19 : i32 to vector<1x512xi32>
    %54 = arith.cmpi sge, %47, %53 : vector<1x512xi32>
    %55 = arith.andi %52, %54 : vector<1x512xi1>
    %c16_i32_20 = arith.constant 16 : i32
    %56 = vector.broadcast %c16_i32_20 : i32 to vector<1x512xi32>
    %57 = arith.cmpi slt, %47, %56 : vector<1x512xi32>
    %58 = arith.andi %55, %57 : vector<1x512xi1>
    %cst_21 = arith.constant 0.000000e+00 : f32
    %59 = vector.shape_cast %58 : vector<1x512xi1> to vector<1x512xi1>
    %60 = vector.broadcast %59 : vector<1x512xi1> to vector<8x512xi1>
    %61 = vector.broadcast %cst_21 : f32 to vector<8x512xf32>
    %62 = arith.select %60, %43, %61 : vector<8x512xi1>, vector<8x512xf32>
    %c1_i32_22 = arith.constant 1 : i32
    %63 = tpu.dynamic_rotate %0 by %c1_i32_22 dim 1 : vector<8x512xf32>, i32 -> vector<8x512xf32>
    %c0_i32_23 = arith.constant 0 : i32
    %64 = vector.broadcast %c0_i32_23 : i32 to vector<1x512xi32>
    %65 = arith.addi %1, %64 : vector<1x512xi32>
    %c-1_i32_24 = arith.constant -1 : i32
    %66 = vector.broadcast %c-1_i32_24 : i32 to vector<1x512xi32>
    %67 = arith.addi %2, %66 : vector<1x512xi32>
    %c0_i32_25 = arith.constant 0 : i32
    %68 = vector.broadcast %c0_i32_25 : i32 to vector<1x512xi32>
    %69 = arith.cmpi sge, %65, %68 : vector<1x512xi32>
    %c16_i32_26 = arith.constant 16 : i32
    %70 = vector.broadcast %c16_i32_26 : i32 to vector<1x512xi32>
    %71 = arith.cmpi slt, %65, %70 : vector<1x512xi32>
    %72 = arith.andi %69, %71 : vector<1x512xi1>
    %c0_i32_27 = arith.constant 0 : i32
    %73 = vector.broadcast %c0_i32_27 : i32 to vector<1x512xi32>
    %74 = arith.cmpi sge, %67, %73 : vector<1x512xi32>
    %75 = arith.andi %72, %74 : vector<1x512xi1>
    %c16_i32_28 = arith.constant 16 : i32
    %76 = vector.broadcast %c16_i32_28 : i32 to vector<1x512xi32>
    %77 = arith.cmpi slt, %67, %76 : vector<1x512xi32>
    %78 = arith.andi %75, %77 : vector<1x512xi1>
    %cst_29 = arith.constant 0.000000e+00 : f32
    %79 = vector.shape_cast %78 : vector<1x512xi1> to vector<1x512xi1>
    %80 = vector.broadcast %79 : vector<1x512xi1> to vector<8x512xi1>
    %81 = vector.broadcast %cst_29 : f32 to vector<8x512xf32>
    %82 = arith.select %80, %63, %81 : vector<8x512xi1>, vector<8x512xf32>
    %c511_i32 = arith.constant 511 : i32
    %83 = tpu.dynamic_rotate %0 by %c511_i32 dim 1 : vector<8x512xf32>, i32 -> vector<8x512xf32>
    %c0_i32_30 = arith.constant 0 : i32
    %84 = vector.broadcast %c0_i32_30 : i32 to vector<1x512xi32>
    %85 = arith.addi %1, %84 : vector<1x512xi32>
    %c1_i32_31 = arith.constant 1 : i32
    %86 = vector.broadcast %c1_i32_31 : i32 to vector<1x512xi32>
    %87 = arith.addi %2, %86 : vector<1x512xi32>
    %c0_i32_32 = arith.constant 0 : i32
    %88 = vector.broadcast %c0_i32_32 : i32 to vector<1x512xi32>
    %89 = arith.cmpi sge, %85, %88 : vector<1x512xi32>
    %c16_i32_33 = arith.constant 16 : i32
    %90 = vector.broadcast %c16_i32_33 : i32 to vector<1x512xi32>
    %91 = arith.cmpi slt, %85, %90 : vector<1x512xi32>
    %92 = arith.andi %89, %91 : vector<1x512xi1>
    %c0_i32_34 = arith.constant 0 : i32
    %93 = vector.broadcast %c0_i32_34 : i32 to vector<1x512xi32>
    %94 = arith.cmpi sge, %87, %93 : vector<1x512xi32>
    %95 = arith.andi %92, %94 : vector<1x512xi1>
    %c16_i32_35 = arith.constant 16 : i32
    %96 = vector.broadcast %c16_i32_35 : i32 to vector<1x512xi32>
    %97 = arith.cmpi slt, %87, %96 : vector<1x512xi32>
    %98 = arith.andi %95, %97 : vector<1x512xi1>
    %cst_36 = arith.constant 0.000000e+00 : f32
    %99 = vector.shape_cast %98 : vector<1x512xi1> to vector<1x512xi1>
    %100 = vector.broadcast %99 : vector<1x512xi1> to vector<8x512xi1>
    %101 = vector.broadcast %cst_36 : f32 to vector<8x512xf32>
    %102 = arith.select %100, %83, %101 : vector<8x512xi1>, vector<8x512xf32>
    %c497_i32 = arith.constant 497 : i32
    %103 = tpu.dynamic_rotate %0 by %c497_i32 dim 1 : vector<8x512xf32>, i32 -> vector<8x512xf32>
    %c1_i32_37 = arith.constant 1 : i32
    %104 = vector.broadcast %c1_i32_37 : i32 to vector<1x512xi32>
    %105 = arith.addi %1, %104 : vector<1x512xi32>
    %c-1_i32_38 = arith.constant -1 : i32
    %106 = vector.broadcast %c-1_i32_38 : i32 to vector<1x512xi32>
    %107 = arith.addi %2, %106 : vector<1x512xi32>
    %c0_i32_39 = arith.constant 0 : i32
    %108 = vector.broadcast %c0_i32_39 : i32 to vector<1x512xi32>
    %109 = arith.cmpi sge, %105, %108 : vector<1x512xi32>
    %c16_i32_40 = arith.constant 16 : i32
    %110 = vector.broadcast %c16_i32_40 : i32 to vector<1x512xi32>
    %111 = arith.cmpi slt, %105, %110 : vector<1x512xi32>
    %112 = arith.andi %109, %111 : vector<1x512xi1>
    %c0_i32_41 = arith.constant 0 : i32
    %113 = vector.broadcast %c0_i32_41 : i32 to vector<1x512xi32>
    %114 = arith.cmpi sge, %107, %113 : vector<1x512xi32>
    %115 = arith.andi %112, %114 : vector<1x512xi1>
    %c16_i32_42 = arith.constant 16 : i32
    %116 = vector.broadcast %c16_i32_42 : i32 to vector<1x512xi32>
    %117 = arith.cmpi slt, %107, %116 : vector<1x512xi32>
    %118 = arith.andi %115, %117 : vector<1x512xi1>
    %cst_43 = arith.constant 0.000000e+00 : f32
    %119 = vector.shape_cast %118 : vector<1x512xi1> to vector<1x512xi1>
    %120 = vector.broadcast %119 : vector<1x512xi1> to vector<8x512xi1>
    %121 = vector.broadcast %cst_43 : f32 to vector<8x512xf32>
    %122 = arith.select %120, %103, %121 : vector<8x512xi1>, vector<8x512xf32>
    %c496_i32 = arith.constant 496 : i32
    %123 = tpu.dynamic_rotate %0 by %c496_i32 dim 1 : vector<8x512xf32>, i32 -> vector<8x512xf32>
    %c1_i32_44 = arith.constant 1 : i32
    %124 = vector.broadcast %c1_i32_44 : i32 to vector<1x512xi32>
    %125 = arith.addi %1, %124 : vector<1x512xi32>
    %c0_i32_45 = arith.constant 0 : i32
    %126 = vector.broadcast %c0_i32_45 : i32 to vector<1x512xi32>
    %127 = arith.addi %2, %126 : vector<1x512xi32>
    %c0_i32_46 = arith.constant 0 : i32
    %128 = vector.broadcast %c0_i32_46 : i32 to vector<1x512xi32>
    %129 = arith.cmpi sge, %125, %128 : vector<1x512xi32>
    %c16_i32_47 = arith.constant 16 : i32
    %130 = vector.broadcast %c16_i32_47 : i32 to vector<1x512xi32>
    %131 = arith.cmpi slt, %125, %130 : vector<1x512xi32>
    %132 = arith.andi %129, %131 : vector<1x512xi1>
    %c0_i32_48 = arith.constant 0 : i32
    %133 = vector.broadcast %c0_i32_48 : i32 to vector<1x512xi32>
    %134 = arith.cmpi sge, %127, %133 : vector<1x512xi32>
    %135 = arith.andi %132, %134 : vector<1x512xi1>
    %c16_i32_49 = arith.constant 16 : i32
    %136 = vector.broadcast %c16_i32_49 : i32 to vector<1x512xi32>
    %137 = arith.cmpi slt, %127, %136 : vector<1x512xi32>
    %138 = arith.andi %135, %137 : vector<1x512xi1>
    %cst_50 = arith.constant 0.000000e+00 : f32
    %139 = vector.shape_cast %138 : vector<1x512xi1> to vector<1x512xi1>
    %140 = vector.broadcast %139 : vector<1x512xi1> to vector<8x512xi1>
    %141 = vector.broadcast %cst_50 : f32 to vector<8x512xf32>
    %142 = arith.select %140, %123, %141 : vector<8x512xi1>, vector<8x512xf32>
    %c495_i32 = arith.constant 495 : i32
    %143 = tpu.dynamic_rotate %0 by %c495_i32 dim 1 : vector<8x512xf32>, i32 -> vector<8x512xf32>
    %c1_i32_51 = arith.constant 1 : i32
    %144 = vector.broadcast %c1_i32_51 : i32 to vector<1x512xi32>
    %145 = arith.addi %1, %144 : vector<1x512xi32>
    %c1_i32_52 = arith.constant 1 : i32
    %146 = vector.broadcast %c1_i32_52 : i32 to vector<1x512xi32>
    %147 = arith.addi %2, %146 : vector<1x512xi32>
    %c0_i32_53 = arith.constant 0 : i32
    %148 = vector.broadcast %c0_i32_53 : i32 to vector<1x512xi32>
    %149 = arith.cmpi sge, %145, %148 : vector<1x512xi32>
    %c16_i32_54 = arith.constant 16 : i32
    %150 = vector.broadcast %c16_i32_54 : i32 to vector<1x512xi32>
    %151 = arith.cmpi slt, %145, %150 : vector<1x512xi32>
    %152 = arith.andi %149, %151 : vector<1x512xi1>
    %c0_i32_55 = arith.constant 0 : i32
    %153 = vector.broadcast %c0_i32_55 : i32 to vector<1x512xi32>
    %154 = arith.cmpi sge, %147, %153 : vector<1x512xi32>
    %155 = arith.andi %152, %154 : vector<1x512xi1>
    %c16_i32_56 = arith.constant 16 : i32
    %156 = vector.broadcast %c16_i32_56 : i32 to vector<1x512xi32>
    %157 = arith.cmpi slt, %147, %156 : vector<1x512xi32>
    %158 = arith.andi %155, %157 : vector<1x512xi1>
    %cst_57 = arith.constant 0.000000e+00 : f32
    %159 = vector.shape_cast %158 : vector<1x512xi1> to vector<1x512xi1>
    %160 = vector.broadcast %159 : vector<1x512xi1> to vector<8x512xi1>
    %161 = vector.broadcast %cst_57 : f32 to vector<8x512xf32>
    %162 = arith.select %160, %143, %161 : vector<8x512xi1>, vector<8x512xf32>
    %163 = tpu.concatenate %22, %42, %62, %82, %0, %102, %122, %142, %162 in 0 : vector<8x512xf32>, vector<8x512xf32>, vector<8x512xf32>, vector<8x512xf32>, vector<8x512xf32>, vector<8x512xf32>, vector<8x512xf32>, vector<8x512xf32>, vector<8x512xf32> -> vector<72x512xf32>
    %c0_58 = arith.constant 0 : index
    %c0_59 = arith.constant 0 : index
    %164 = vector.load %arg2[%c0_58, %c0_59] : memref<8x72xf32, #tpu.memory_space<vmem>>, vector<8x72xf32>
    %cst_60 = arith.constant dense<0.000000e+00> : vector<8x512xf32>
    %165 = tpu.matmul %164, %163, %cst_60 {dimension_numbers = #tpu.dot_dimension_numbers<[1], [0], [0], [1], [0, 0, 1, 1], [], []>} : vector<8x72xf32>, vector<72x512xf32>, vector<8x512xf32> -> vector<8x512xf32>
    %c0_61 = arith.constant 0 : index
    %c0_62 = arith.constant 0 : index
    %166 = vector.load %arg3[%c0_61, %c0_62] : memref<8x1xf32, #tpu.memory_space<vmem>>, vector<8x1xf32>
    %167 = vector.broadcast %166 : vector<8x1xf32> to vector<8x512xf32>
    %168 = arith.addf %165, %167 : vector<8x512xf32>
    %cst_63 = arith.constant 0.000000e+00 : f32
    %169 = vector.broadcast %cst_63 : f32 to vector<8x512xf32>
    %170 = arith.maximumf %168, %169 : vector<8x512xf32>
    %c17_i32_64 = arith.constant 17 : i32
    %171 = tpu.dynamic_rotate %170 by %c17_i32_64 dim 1 : vector<8x512xf32>, i32 -> vector<8x512xf32>
    %c-1_i32_65 = arith.constant -1 : i32
    %172 = vector.broadcast %c-1_i32_65 : i32 to vector<1x512xi32>
    %173 = arith.addi %1, %172 : vector<1x512xi32>
    %c-1_i32_66 = arith.constant -1 : i32
    %174 = vector.broadcast %c-1_i32_66 : i32 to vector<1x512xi32>
    %175 = arith.addi %2, %174 : vector<1x512xi32>
    %c0_i32_67 = arith.constant 0 : i32
    %176 = vector.broadcast %c0_i32_67 : i32 to vector<1x512xi32>
    %177 = arith.cmpi sge, %173, %176 : vector<1x512xi32>
    %c16_i32_68 = arith.constant 16 : i32
    %178 = vector.broadcast %c16_i32_68 : i32 to vector<1x512xi32>
    %179 = arith.cmpi slt, %173, %178 : vector<1x512xi32>
    %180 = arith.andi %177, %179 : vector<1x512xi1>
    %c0_i32_69 = arith.constant 0 : i32
    %181 = vector.broadcast %c0_i32_69 : i32 to vector<1x512xi32>
    %182 = arith.cmpi sge, %175, %181 : vector<1x512xi32>
    %183 = arith.andi %180, %182 : vector<1x512xi1>
    %c16_i32_70 = arith.constant 16 : i32
    %184 = vector.broadcast %c16_i32_70 : i32 to vector<1x512xi32>
    %185 = arith.cmpi slt, %175, %184 : vector<1x512xi32>
    %186 = arith.andi %183, %185 : vector<1x512xi1>
    %cst_71 = arith.constant 0.000000e+00 : f32
    %187 = vector.shape_cast %186 : vector<1x512xi1> to vector<1x512xi1>
    %188 = vector.broadcast %187 : vector<1x512xi1> to vector<8x512xi1>
    %189 = vector.broadcast %cst_71 : f32 to vector<8x512xf32>
    %190 = arith.select %188, %171, %189 : vector<8x512xi1>, vector<8x512xf32>
    %c16_i32_72 = arith.constant 16 : i32
    %191 = tpu.dynamic_rotate %170 by %c16_i32_72 dim 1 : vector<8x512xf32>, i32 -> vector<8x512xf32>
    %c-1_i32_73 = arith.constant -1 : i32
    %192 = vector.broadcast %c-1_i32_73 : i32 to vector<1x512xi32>
    %193 = arith.addi %1, %192 : vector<1x512xi32>
    %c0_i32_74 = arith.constant 0 : i32
    %194 = vector.broadcast %c0_i32_74 : i32 to vector<1x512xi32>
    %195 = arith.addi %2, %194 : vector<1x512xi32>
    %c0_i32_75 = arith.constant 0 : i32
    %196 = vector.broadcast %c0_i32_75 : i32 to vector<1x512xi32>
    %197 = arith.cmpi sge, %193, %196 : vector<1x512xi32>
    %c16_i32_76 = arith.constant 16 : i32
    %198 = vector.broadcast %c16_i32_76 : i32 to vector<1x512xi32>
    %199 = arith.cmpi slt, %193, %198 : vector<1x512xi32>
    %200 = arith.andi %197, %199 : vector<1x512xi1>
    %c0_i32_77 = arith.constant 0 : i32
    %201 = vector.broadcast %c0_i32_77 : i32 to vector<1x512xi32>
    %202 = arith.cmpi sge, %195, %201 : vector<1x512xi32>
    %203 = arith.andi %200, %202 : vector<1x512xi1>
    %c16_i32_78 = arith.constant 16 : i32
    %204 = vector.broadcast %c16_i32_78 : i32 to vector<1x512xi32>
    %205 = arith.cmpi slt, %195, %204 : vector<1x512xi32>
    %206 = arith.andi %203, %205 : vector<1x512xi1>
    %cst_79 = arith.constant 0.000000e+00 : f32
    %207 = vector.shape_cast %206 : vector<1x512xi1> to vector<1x512xi1>
    %208 = vector.broadcast %207 : vector<1x512xi1> to vector<8x512xi1>
    %209 = vector.broadcast %cst_79 : f32 to vector<8x512xf32>
    %210 = arith.select %208, %191, %209 : vector<8x512xi1>, vector<8x512xf32>
    %c15_i32_80 = arith.constant 15 : i32
    %211 = tpu.dynamic_rotate %170 by %c15_i32_80 dim 1 : vector<8x512xf32>, i32 -> vector<8x512xf32>
    %c-1_i32_81 = arith.constant -1 : i32
    %212 = vector.broadcast %c-1_i32_81 : i32 to vector<1x512xi32>
    %213 = arith.addi %1, %212 : vector<1x512xi32>
    %c1_i32_82 = arith.constant 1 : i32
    %214 = vector.broadcast %c1_i32_82 : i32 to vector<1x512xi32>
    %215 = arith.addi %2, %214 : vector<1x512xi32>
    %c0_i32_83 = arith.constant 0 : i32
    %216 = vector.broadcast %c0_i32_83 : i32 to vector<1x512xi32>
    %217 = arith.cmpi sge, %213, %216 : vector<1x512xi32>
    %c16_i32_84 = arith.constant 16 : i32
    %218 = vector.broadcast %c16_i32_84 : i32 to vector<1x512xi32>
    %219 = arith.cmpi slt, %213, %218 : vector<1x512xi32>
    %220 = arith.andi %217, %219 : vector<1x512xi1>
    %c0_i32_85 = arith.constant 0 : i32
    %221 = vector.broadcast %c0_i32_85 : i32 to vector<1x512xi32>
    %222 = arith.cmpi sge, %215, %221 : vector<1x512xi32>
    %223 = arith.andi %220, %222 : vector<1x512xi1>
    %c16_i32_86 = arith.constant 16 : i32
    %224 = vector.broadcast %c16_i32_86 : i32 to vector<1x512xi32>
    %225 = arith.cmpi slt, %215, %224 : vector<1x512xi32>
    %226 = arith.andi %223, %225 : vector<1x512xi1>
    %cst_87 = arith.constant 0.000000e+00 : f32
    %227 = vector.shape_cast %226 : vector<1x512xi1> to vector<1x512xi1>
    %228 = vector.broadcast %227 : vector<1x512xi1> to vector<8x512xi1>
    %229 = vector.broadcast %cst_87 : f32 to vector<8x512xf32>
    %230 = arith.select %228, %211, %229 : vector<8x512xi1>, vector<8x512xf32>
    %c1_i32_88 = arith.constant 1 : i32
    %231 = tpu.dynamic_rotate %170 by %c1_i32_88 dim 1 : vector<8x512xf32>, i32 -> vector<8x512xf32>
    %c0_i32_89 = arith.constant 0 : i32
    %232 = vector.broadcast %c0_i32_89 : i32 to vector<1x512xi32>
    %233 = arith.addi %1, %232 : vector<1x512xi32>
    %c-1_i32_90 = arith.constant -1 : i32
    %234 = vector.broadcast %c-1_i32_90 : i32 to vector<1x512xi32>
    %235 = arith.addi %2, %234 : vector<1x512xi32>
    %c0_i32_91 = arith.constant 0 : i32
    %236 = vector.broadcast %c0_i32_91 : i32 to vector<1x512xi32>
    %237 = arith.cmpi sge, %233, %236 : vector<1x512xi32>
    %c16_i32_92 = arith.constant 16 : i32
    %238 = vector.broadcast %c16_i32_92 : i32 to vector<1x512xi32>
    %239 = arith.cmpi slt, %233, %238 : vector<1x512xi32>
    %240 = arith.andi %237, %239 : vector<1x512xi1>
    %c0_i32_93 = arith.constant 0 : i32
    %241 = vector.broadcast %c0_i32_93 : i32 to vector<1x512xi32>
    %242 = arith.cmpi sge, %235, %241 : vector<1x512xi32>
    %243 = arith.andi %240, %242 : vector<1x512xi1>
    %c16_i32_94 = arith.constant 16 : i32
    %244 = vector.broadcast %c16_i32_94 : i32 to vector<1x512xi32>
    %245 = arith.cmpi slt, %235, %244 : vector<1x512xi32>
    %246 = arith.andi %243, %245 : vector<1x512xi1>
    %cst_95 = arith.constant 0.000000e+00 : f32
    %247 = vector.shape_cast %246 : vector<1x512xi1> to vector<1x512xi1>
    %248 = vector.broadcast %247 : vector<1x512xi1> to vector<8x512xi1>
    %249 = vector.broadcast %cst_95 : f32 to vector<8x512xf32>
    %250 = arith.select %248, %231, %249 : vector<8x512xi1>, vector<8x512xf32>
    %c511_i32_96 = arith.constant 511 : i32
    %251 = tpu.dynamic_rotate %170 by %c511_i32_96 dim 1 : vector<8x512xf32>, i32 -> vector<8x512xf32>
    %c0_i32_97 = arith.constant 0 : i32
    %252 = vector.broadcast %c0_i32_97 : i32 to vector<1x512xi32>
    %253 = arith.addi %1, %252 : vector<1x512xi32>
    %c1_i32_98 = arith.constant 1 : i32
    %254 = vector.broadcast %c1_i32_98 : i32 to vector<1x512xi32>
    %255 = arith.addi %2, %254 : vector<1x512xi32>
    %c0_i32_99 = arith.constant 0 : i32
    %256 = vector.broadcast %c0_i32_99 : i32 to vector<1x512xi32>
    %257 = arith.cmpi sge, %253, %256 : vector<1x512xi32>
    %c16_i32_100 = arith.constant 16 : i32
    %258 = vector.broadcast %c16_i32_100 : i32 to vector<1x512xi32>
    %259 = arith.cmpi slt, %253, %258 : vector<1x512xi32>
    %260 = arith.andi %257, %259 : vector<1x512xi1>
    %c0_i32_101 = arith.constant 0 : i32
    %261 = vector.broadcast %c0_i32_101 : i32 to vector<1x512xi32>
    %262 = arith.cmpi sge, %255, %261 : vector<1x512xi32>
    %263 = arith.andi %260, %262 : vector<1x512xi1>
    %c16_i32_102 = arith.constant 16 : i32
    %264 = vector.broadcast %c16_i32_102 : i32 to vector<1x512xi32>
    %265 = arith.cmpi slt, %255, %264 : vector<1x512xi32>
    %266 = arith.andi %263, %265 : vector<1x512xi1>
    %cst_103 = arith.constant 0.000000e+00 : f32
    %267 = vector.shape_cast %266 : vector<1x512xi1> to vector<1x512xi1>
    %268 = vector.broadcast %267 : vector<1x512xi1> to vector<8x512xi1>
    %269 = vector.broadcast %cst_103 : f32 to vector<8x512xf32>
    %270 = arith.select %268, %251, %269 : vector<8x512xi1>, vector<8x512xf32>
    %c497_i32_104 = arith.constant 497 : i32
    %271 = tpu.dynamic_rotate %170 by %c497_i32_104 dim 1 : vector<8x512xf32>, i32 -> vector<8x512xf32>
    %c1_i32_105 = arith.constant 1 : i32
    %272 = vector.broadcast %c1_i32_105 : i32 to vector<1x512xi32>
    %273 = arith.addi %1, %272 : vector<1x512xi32>
    %c-1_i32_106 = arith.constant -1 : i32
    %274 = vector.broadcast %c-1_i32_106 : i32 to vector<1x512xi32>
    %275 = arith.addi %2, %274 : vector<1x512xi32>
    %c0_i32_107 = arith.constant 0 : i32
    %276 = vector.broadcast %c0_i32_107 : i32 to vector<1x512xi32>
    %277 = arith.cmpi sge, %273, %276 : vector<1x512xi32>
    %c16_i32_108 = arith.constant 16 : i32
    %278 = vector.broadcast %c16_i32_108 : i32 to vector<1x512xi32>
    %279 = arith.cmpi slt, %273, %278 : vector<1x512xi32>
    %280 = arith.andi %277, %279 : vector<1x512xi1>
    %c0_i32_109 = arith.constant 0 : i32
    %281 = vector.broadcast %c0_i32_109 : i32 to vector<1x512xi32>
    %282 = arith.cmpi sge, %275, %281 : vector<1x512xi32>
    %283 = arith.andi %280, %282 : vector<1x512xi1>
    %c16_i32_110 = arith.constant 16 : i32
    %284 = vector.broadcast %c16_i32_110 : i32 to vector<1x512xi32>
    %285 = arith.cmpi slt, %275, %284 : vector<1x512xi32>
    %286 = arith.andi %283, %285 : vector<1x512xi1>
    %cst_111 = arith.constant 0.000000e+00 : f32
    %287 = vector.shape_cast %286 : vector<1x512xi1> to vector<1x512xi1>
    %288 = vector.broadcast %287 : vector<1x512xi1> to vector<8x512xi1>
    %289 = vector.broadcast %cst_111 : f32 to vector<8x512xf32>
    %290 = arith.select %288, %271, %289 : vector<8x512xi1>, vector<8x512xf32>
    %c496_i32_112 = arith.constant 496 : i32
    %291 = tpu.dynamic_rotate %170 by %c496_i32_112 dim 1 : vector<8x512xf32>, i32 -> vector<8x512xf32>
    %c1_i32_113 = arith.constant 1 : i32
    %292 = vector.broadcast %c1_i32_113 : i32 to vector<1x512xi32>
    %293 = arith.addi %1, %292 : vector<1x512xi32>
    %c0_i32_114 = arith.constant 0 : i32
    %294 = vector.broadcast %c0_i32_114 : i32 to vector<1x512xi32>
    %295 = arith.addi %2, %294 : vector<1x512xi32>
    %c0_i32_115 = arith.constant 0 : i32
    %296 = vector.broadcast %c0_i32_115 : i32 to vector<1x512xi32>
    %297 = arith.cmpi sge, %293, %296 : vector<1x512xi32>
    %c16_i32_116 = arith.constant 16 : i32
    %298 = vector.broadcast %c16_i32_116 : i32 to vector<1x512xi32>
    %299 = arith.cmpi slt, %293, %298 : vector<1x512xi32>
    %300 = arith.andi %297, %299 : vector<1x512xi1>
    %c0_i32_117 = arith.constant 0 : i32
    %301 = vector.broadcast %c0_i32_117 : i32 to vector<1x512xi32>
    %302 = arith.cmpi sge, %295, %301 : vector<1x512xi32>
    %303 = arith.andi %300, %302 : vector<1x512xi1>
    %c16_i32_118 = arith.constant 16 : i32
    %304 = vector.broadcast %c16_i32_118 : i32 to vector<1x512xi32>
    %305 = arith.cmpi slt, %295, %304 : vector<1x512xi32>
    %306 = arith.andi %303, %305 : vector<1x512xi1>
    %cst_119 = arith.constant 0.000000e+00 : f32
    %307 = vector.shape_cast %306 : vector<1x512xi1> to vector<1x512xi1>
    %308 = vector.broadcast %307 : vector<1x512xi1> to vector<8x512xi1>
    %309 = vector.broadcast %cst_119 : f32 to vector<8x512xf32>
    %310 = arith.select %308, %291, %309 : vector<8x512xi1>, vector<8x512xf32>
    %c495_i32_120 = arith.constant 495 : i32
    %311 = tpu.dynamic_rotate %170 by %c495_i32_120 dim 1 : vector<8x512xf32>, i32 -> vector<8x512xf32>
    %c1_i32_121 = arith.constant 1 : i32
    %312 = vector.broadcast %c1_i32_121 : i32 to vector<1x512xi32>
    %313 = arith.addi %1, %312 : vector<1x512xi32>
    %c1_i32_122 = arith.constant 1 : i32
    %314 = vector.broadcast %c1_i32_122 : i32 to vector<1x512xi32>
    %315 = arith.addi %2, %314 : vector<1x512xi32>
    %c0_i32_123 = arith.constant 0 : i32
    %316 = vector.broadcast %c0_i32_123 : i32 to vector<1x512xi32>
    %317 = arith.cmpi sge, %313, %316 : vector<1x512xi32>
    %c16_i32_124 = arith.constant 16 : i32
    %318 = vector.broadcast %c16_i32_124 : i32 to vector<1x512xi32>
    %319 = arith.cmpi slt, %313, %318 : vector<1x512xi32>
    %320 = arith.andi %317, %319 : vector<1x512xi1>
    %c0_i32_125 = arith.constant 0 : i32
    %321 = vector.broadcast %c0_i32_125 : i32 to vector<1x512xi32>
    %322 = arith.cmpi sge, %315, %321 : vector<1x512xi32>
    %323 = arith.andi %320, %322 : vector<1x512xi1>
    %c16_i32_126 = arith.constant 16 : i32
    %324 = vector.broadcast %c16_i32_126 : i32 to vector<1x512xi32>
    %325 = arith.cmpi slt, %315, %324 : vector<1x512xi32>
    %326 = arith.andi %323, %325 : vector<1x512xi1>
    %cst_127 = arith.constant 0.000000e+00 : f32
    %327 = vector.shape_cast %326 : vector<1x512xi1> to vector<1x512xi1>
    %328 = vector.broadcast %327 : vector<1x512xi1> to vector<8x512xi1>
    %329 = vector.broadcast %cst_127 : f32 to vector<8x512xf32>
    %330 = arith.select %328, %311, %329 : vector<8x512xi1>, vector<8x512xf32>
    %331 = tpu.concatenate %190, %210, %230, %250, %170, %270, %290, %310, %330 in 0 : vector<8x512xf32>, vector<8x512xf32>, vector<8x512xf32>, vector<8x512xf32>, vector<8x512xf32>, vector<8x512xf32>, vector<8x512xf32>, vector<8x512xf32>, vector<8x512xf32> -> vector<72x512xf32>
    %c0_128 = arith.constant 0 : index
    %c0_129 = arith.constant 0 : index
    %332 = vector.load %arg4[%c0_128, %c0_129] : memref<4x72xf32, #tpu.memory_space<vmem>>, vector<4x72xf32>
    %cst_130 = arith.constant dense<0.000000e+00> : vector<4x512xf32>
    %333 = tpu.matmul %332, %331, %cst_130 {dimension_numbers = #tpu.dot_dimension_numbers<[1], [0], [0], [1], [0, 0, 1, 1], [], []>} : vector<4x72xf32>, vector<72x512xf32>, vector<4x512xf32> -> vector<4x512xf32>
    %cst_131 = arith.constant dense<0.000000e+00> : vector<4xf32>
    %334 = vector.multi_reduction <add>, %333, %cst_131 [1] : vector<4x512xf32> to vector<4xf32>
    %335 = vector.shape_cast %334 : vector<4xf32> to vector<4x1xf32>
    %336 = arith.mulf %333, %333 : vector<4x512xf32>
    %cst_132 = arith.constant dense<0.000000e+00> : vector<4xf32>
    %337 = vector.multi_reduction <add>, %336, %cst_132 [1] : vector<4x512xf32> to vector<4xf32>
    %338 = vector.shape_cast %337 : vector<4xf32> to vector<4x1xf32>
    %cst_133 = arith.constant 0.001953125 : f32
    %339 = vector.broadcast %cst_133 : f32 to vector<4x1xf32>
    %340 = arith.mulf %335, %339 : vector<4x1xf32>
    %cst_134 = arith.constant 0.001953125 : f32
    %341 = vector.broadcast %cst_134 : f32 to vector<4x1xf32>
    %342 = arith.mulf %338, %341 : vector<4x1xf32>
    %343 = arith.mulf %340, %340 : vector<4x1xf32>
    %344 = arith.subf %342, %343 : vector<4x1xf32>
    %cst_135 = arith.constant 9.99999974E-6 : f32
    %345 = vector.broadcast %cst_135 : f32 to vector<4x1xf32>
    %346 = arith.addf %344, %345 : vector<4x1xf32>
    %347 = math.rsqrt %346 : vector<4x1xf32>
    %c0_136 = arith.constant 0 : index
    %c0_137 = arith.constant 0 : index
    %348 = vector.load %arg5[%c0_136, %c0_137] : memref<4x1xf32, #tpu.memory_space<vmem>>, vector<4x1xf32>
    %349 = arith.mulf %347, %348 : vector<4x1xf32>
    %350 = vector.broadcast %340 : vector<4x1xf32> to vector<4x512xf32>
    %351 = arith.subf %333, %350 : vector<4x512xf32>
    %352 = vector.broadcast %349 : vector<4x1xf32> to vector<4x512xf32>
    %353 = arith.mulf %351, %352 : vector<4x512xf32>
    %c0_138 = arith.constant 0 : index
    %c0_139 = arith.constant 0 : index
    %354 = vector.load %arg6[%c0_138, %c0_139] : memref<4x1xf32, #tpu.memory_space<vmem>>, vector<4x1xf32>
    %355 = vector.broadcast %354 : vector<4x1xf32> to vector<4x512xf32>
    %356 = arith.addf %353, %355 : vector<4x512xf32>
    %357 = vector.extract_strided_slice %0 {offsets = [0, 0], sizes = [4, 512], strides = [1, 1]} : vector<8x512xf32> to vector<4x512xf32>
    %358 = arith.addf %356, %357 : vector<4x512xf32>
    %c0_140 = arith.constant 0 : index
    %c0_141 = arith.constant 0 : index
    %359 = vector.load %arg9[%c0_140, %c0_141] : memref<4x512xf32, #tpu.memory_space<vmem>>, vector<4x512xf32>
    tpu.vector_store %arg9[%c0_140, %c0_141], %358 {strides = array<i32>} : memref<4x512xf32, #tpu.memory_space<vmem>>, vector<4x512xf32>,
    return
  }
  func.func @transform_0(%arg0: i32) -> (i32, i32) {
    %c0_i32 = arith.constant 0 : i32
    %c0_i32_0 = arith.constant 0 : i32
    %c0_i32_1 = arith.constant 0 : i32
    return %c0_i32, %c0_i32_0 : i32, i32
  }
  func.func @transform_1(%arg0: i32) -> (i32, i32) {
    %c0_i32 = arith.constant 0 : i32
    %c0_i32_0 = arith.constant 0 : i32
    %c0_i32_1 = arith.constant 0 : i32
    return %c0_i32, %c0_i32_0 : i32, i32
  }
  func.func @transform_2(%arg0: i32) -> (i32, i32) {
    %c0_i32 = arith.constant 0 : i32
    %c0_i32_0 = arith.constant 0 : i32
    %c0_i32_1 = arith.constant 0 : i32
    return %c0_i32, %c0_i32_0 : i32, i32
  }
  func.func @transform_3(%arg0: i32) -> (i32, i32) {
    %c0_i32 = arith.constant 0 : i32
    %c0_i32_0 = arith.constant 0 : i32
    %c0_i32_1 = arith.constant 0 : i32
    return %c0_i32, %c0_i32_0 : i32, i32
  }
  func.func @transform_4(%arg0: i32) -> (i32, i32) {
    %c0_i32 = arith.constant 0 : i32
    %c0_i32_0 = arith.constant 0 : i32
    %c0_i32_1 = arith.constant 0 : i32
    return %c0_i32, %c0_i32_0 : i32, i32
  }
  func.func @transform_5(%arg0: i32) -> (i32, i32) {
    %c0_i32 = arith.constant 0 : i32
    %c0_i32_0 = arith.constant 0 : i32
    %c0_i32_1 = arith.constant 0 : i32
    return %c0_i32, %c0_i32_0 : i32, i32
  }
  func.func @transform_6(%arg0: i32) -> (i32, i32) {
    %c0_i32 = arith.constant 0 : i32
    %c0_i32_0 = arith.constant 0 : i32
    %c0_i32_1 = arith.constant 0 : i32
    return %c0_i32, %c0_i32_0 : i32, i32
  }
  func.func @transform_7(%arg0: i32) -> (i32, i32) {
    %c0_i32 = arith.constant 0 : i32
    %c0_i32_0 = arith.constant 0 : i32
    %c0_i32_1 = arith.constant 0 : i32
    return %c0_i32, %c0_i32_0 : i32, i32
  }
  func.func @transform_8(%arg0: i32) -> (i32, i32) {
    %c0_i32 = arith.constant 0 : i32
    %c0_i32_0 = arith.constant 0 : i32
    %c0_i32_1 = arith.constant 0 : i32
    return %c0_i32, %c0_i32_0 : i32, i32
  }
}

</mosaic_0001>

<llo_original>
// kernel: tpu_custom_call.1
$region0: #{tpu_custom_call.1}
  #allocation0 [shape = 'u32[]', space=smem, size = 0x4, offset = 0x4, fixed_abs, tag = 'smem constant byte address 0x4 - core index']
  #allocation1 [shape = 'u32[144,128]{1,0:T(1,128)}', space=vmem, size = 0x12000, scoped, tag = 'internal scratch']
  %s0 = inlined_call_operand.hbm [shape: f32[8,512], index: 0, kind: input, shape index: {}]
  %s1 = inlined_call_operand.vmem [shape: f32[8,72], index: 1, kind: input, shape index: {}]
  %s2 = inlined_call_operand.vmem [shape: f32[8,1], index: 2, kind: input, shape index: {}]
  %s3 = inlined_call_operand.vmem [shape: f32[4,72], index: 3, kind: input, shape index: {}]
  %s4 = inlined_call_operand.vmem [shape: f32[4,1], index: 4, kind: input, shape index: {}]
  %s5 = inlined_call_operand.vmem [shape: f32[4,1], index: 5, kind: input, shape index: {}]
  %s6 = inlined_call_operand.vmem [shape: s32[1,512], index: 6, kind: input, shape index: {}]
  %s7 = inlined_call_operand.vmem [shape: s32[1,512], index: 7, kind: input, shape index: {}]
  %s8 = inlined_call_operand.hbm [shape: f32[4,512], index: 8, kind: output, shape index: {}]
  %s9 = sld [smem:[#allocation0]]
  $region46: #{tpu_custom_call.1} parent=0
    _
  %s11 = ssub.s32 1, %s9
  %s12 = scalar_select 0, %s11, %s9
  $region1: #{tpu_custom_call.1} parent=0
    #allocation2 [shape = 'u8[16384]{0}', space=vmem, size = 0x4000, scoped, tag = 'input window, operand 0, single buffered']
    #allocation3 [shape = 's32[1]{0}', space=sflag, size = 0x4, scoped, tag = 'scoped memory for tpu_custom_call.1']
    #allocation4 [shape = 's32[1]{0}', space=sflag, size = 0x4, scoped, tag = 'scoped memory for tpu_custom_call.1']
    #allocation5 [shape = 'u8[8192]{0}', space=vmem, size = 0x2000, scoped, tag = 'output window, operand 0, single buffered']
    %13 = vsyncpa [#allocation3], 0
    %14 = vsyncpa [#allocation4], 0
    // Predicated region
    $region2: #{tpu_custom_call.1} parent=1 // pred_check
      _
    $region3: #{tpu_custom_call.1} parent=1 // pred_check_branch
      %16 = sbr.rel (0) target = $region5
    $region4: #{tpu_custom_call.1} parent=1 // pred_region
      %s18 = ssub.s32 512, 512
      %19 = vsyncadd [#allocation3], %s18
      %s21 = sshll.u32 [#allocation2], 4
      %s22 = int_to_ptr.vmem [resolvable:$true] %s21
      %24 = dma.hbm_to_vmem [thread:$0]  %s0, 512, %s22, [#allocation3]
    $region5: #{tpu_custom_call.1} parent=1 // pred_fallthru
      _
    // Predicated region
    $region6: #{tpu_custom_call.1} parent=1 // pred_check
      _
    $region7: #{tpu_custom_call.1} parent=1 // pred_check_branch
      %26 = sbr.rel (0) target = $region9
    $region8: #{tpu_custom_call.1} parent=1 // pred_region
      _
    $region9: #{tpu_custom_call.1} parent=1 // pred_fallthru
      _
    // Predicated region
    $region10: #{tpu_custom_call.1} parent=1 // pred_check
      _
    $region11: #{tpu_custom_call.1} parent=1 // pred_check_branch
      %28 = sbr.rel (0) target = $region13
    $region12: #{tpu_custom_call.1} parent=1 // pred_region
      _
    $region13: #{tpu_custom_call.1} parent=1 // pred_fallthru
      _
    // Predicated region
    $region14: #{tpu_custom_call.1} parent=1 // pred_check
      _
    $region15: #{tpu_custom_call.1} parent=1 // pred_check_branch
      %30 = sbr.rel (0) target = $region17
    $region16: #{tpu_custom_call.1} parent=1 // pred_region
      _
    $region17: #{tpu_custom_call.1} parent=1 // pred_fallthru
      _
    // Predicated region
    $region18: #{tpu_custom_call.1} parent=1 // pred_check
      _
    $region19: #{tpu_custom_call.1} parent=1 // pred_check_branch
      %32 = sbr.rel (0) target = $region21
    $region20: #{tpu_custom_call.1} parent=1 // pred_region
      _
    $region21: #{tpu_custom_call.1} parent=1 // pred_fallthru
      _
    // Predicated region
    $region22: #{tpu_custom_call.1} parent=1 // pred_check
      _
    $region23: #{tpu_custom_call.1} parent=1 // pred_check_branch
      %34 = sbr.rel (0) target = $region25
    $region24: #{tpu_custom_call.1} parent=1 // pred_region
      _
    $region25: #{tpu_custom_call.1} parent=1 // pred_fallthru
      _
    // Predicated region
    $region26: #{tpu_custom_call.1} parent=1 // pred_check
      _
    $region27: #{tpu_custom_call.1} parent=1 // pred_check_branch
      %36 = sbr.rel (0) target = $region29
    $region28: #{tpu_custom_call.1} parent=1 // pred_region
      _
    $region29: #{tpu_custom_call.1} parent=1 // pred_fallthru
      _
    // Predicated region
    $region30: #{tpu_custom_call.1} parent=1 // pred_check
      _
    $region31: #{tpu_custom_call.1} parent=1 // pred_check_branch
      %38 = sbr.rel (0) target = $region33
    $region32: #{tpu_custom_call.1} parent=1 // pred_region
      _
    $region33: #{tpu_custom_call.1} parent=1 // pred_fallthru
      _
    // Predicated region
    $region34: #{tpu_custom_call.1} parent=1 // pred_check
      _
    $region35: #{tpu_custom_call.1} parent=1 // pred_check_branch
      %40 = sbr.rel (0) target = $region37
    $region36: #{tpu_custom_call.1} parent=1 // pred_region
      %41 = dma.done [#allocation3], 512
    $region37: #{tpu_custom_call.1} parent=1 // pred_fallthru
      _
    %v42 = vld [vmem:[#allocation2] sm:$0xff]
    %v43 = vld [vmem:[#allocation2 + $0x8] sm:$0xff]
    %v44 = vld [vmem:[#allocation2 + $0x10] sm:$0xff]
    %v45 = vld [vmem:[#allocation2 + $0x18] sm:$0xff]
    %v46 = vld [vmem:[%s6] sm:$0xf]
    %v47 = vld [vmem:[%s7] sm:$0xf]
    %48 = vrot.lane.b32.xlu0 %v42, 17
    %v49 = vpop.permute.xlu0 %48
    %50 = vrot.lane.b32.xlu0 %v43, 17
    %v51 = vpop.permute.xlu0 %50
    %52 = vrot.lane.b32.xlu0 %v44, 17
    %v53 = vpop.permute.xlu0 %52
    %54 = vrot.lane.b32.xlu0 %v45, 17
    %v55 = vpop.permute.xlu0 %54
    %v56 = vlaneseq
    %v57 = vand.u32 %v56, 127
    %vm58 = vcmp.lt.s32.totalorder %v57, 17
    %v59 = vsel %vm58, %v53, %v55
    %v60 = vsel %vm58, %v51, %v53
    %v61 = vsel %vm58, %v49, %v51
    %v62 = vsel %vm58, %v55, %v49
    %v63 = vadd.s32 %v46, 4294967295
    %v64 = vadd.s32 %v47, 4294967295
    %vm65 = vcmp.ge.s32.totalorder %v63, 0
    %vm66 = vcmp.lt.s32.totalorder %v63, 16
    %vm67 = vmand %vm65, %vm66
    %vm68 = vcmp.ge.s32.totalorder %v64, 0
    %vm69 = vmand %vm67, %vm68
    %vm70 = vcmp.lt.s32.totalorder %v64, 16
    %vm71 = vmand %vm69, %vm70
    %v72 = vsel %vm71, 1, 0
    %v73 = vlaneseq
    %v74 = vshrl.u32 %v73, 7
    %v75 = vsub.s32 0, %v74
    %v76 = vrot.slane %v72, %v75
    %v77 = vlaneseq
    %v78 = vshrl.u32 %v77, 7
    %v79 = vsub.s32 1, %v78
    %v80 = vrot.slane %v72, %v79
    %v81 = vlaneseq
    %v82 = vshrl.u32 %v81, 7
    %v83 = vsub.s32 2, %v82
    %v84 = vrot.slane %v72, %v83
    %v85 = vlaneseq
    %v86 = vshrl.u32 %v85, 7
    %v87 = vsub.s32 3, %v86
    %v88 = vrot.slane %v72, %v87
    %vm89 = vcmp.eq.s32.totalorder %v76, 1
    %vm90 = vcmp.eq.s32.totalorder %v80, 1
    %vm91 = vcmp.eq.s32.totalorder %v84, 1
    %vm92 = vcmp.eq.s32.totalorder %v88, 1
    %v93 = vsel %vm89, %v62, 0.0
    %v94 = vsel %vm90, %v61, 0.0
    %v95 = vsel %vm91, %v60, 0.0
    %v96 = vsel %vm92, %v59, 0.0
    %97 = vrot.lane.b32.xlu0 %v42, 16
    %v98 = vpop.permute.xlu0 %97
    %99 = vrot.lane.b32.xlu0 %v43, 16
    %v100 = vpop.permute.xlu0 %99
    %101 = vrot.lane.b32.xlu0 %v44, 16
    %v102 = vpop.permute.xlu0 %101
    %103 = vrot.lane.b32.xlu0 %v45, 16
    %v104 = vpop.permute.xlu0 %103
    %vm105 = vcmp.lt.s32.totalorder %v57, 16
    %v106 = vsel %vm105, %v102, %v104
    %v107 = vsel %vm105, %v100, %v102
    %v108 = vsel %vm105, %v98, %v100
    %v109 = vsel %vm105, %v104, %v98
    %vm110 = vcmp.ge.s32.totalorder %v47, 0
    %vm111 = vmand %vm67, %vm110
    %vm112 = vcmp.lt.s32.totalorder %v47, 16
    %vm113 = vmand %vm111, %vm112
    %v114 = vsel %vm113, 1, 0
    %v115 = vlaneseq
    %v116 = vshrl.u32 %v115, 7
    %v117 = vsub.s32 0, %v116
    %v118 = vrot.slane %v114, %v117
    %v119 = vlaneseq
    %v120 = vshrl.u32 %v119, 7
    %v121 = vsub.s32 1, %v120
    %v122 = vrot.slane %v114, %v121
    %v123 = vlaneseq
    %v124 = vshrl.u32 %v123, 7
    %v125 = vsub.s32 2, %v124
    %v126 = vrot.slane %v114, %v125
    %v127 = vlaneseq
    %v128 = vshrl.u32 %v127, 7
    %v129 = vsub.s32 3, %v128
    %v130 = vrot.slane %v114, %v129
    %vm131 = vcmp.eq.s32.totalorder %v118, 1
    %vm132 = vcmp.eq.s32.totalorder %v122, 1
    %vm133 = vcmp.eq.s32.totalorder %v126, 1
    %vm134 = vcmp.eq.s32.totalorder %v130, 1
    %v135 = vsel %vm131, %v109, 0.0
    %v136 = vsel %vm132, %v108, 0.0
    %v137 = vsel %vm133, %v107, 0.0
    %v138 = vsel %vm134, %v106, 0.0
    %139 = vrot.lane.b32.xlu0 %v42, 15
    %v140 = vpop.permute.xlu0 %139
    %141 = vrot.lane.b32.xlu0 %v43, 15
    %v142 = vpop.permute.xlu0 %141
    %143 = vrot.lane.b32.xlu0 %v44, 15
    %v144 = vpop.permute.xlu0 %143
    %145 = vrot.lane.b32.xlu0 %v45, 15
    %v146 = vpop.permute.xlu0 %145
    %vm147 = vcmp.lt.s32.totalorder %v57, 15
    %v148 = vsel %vm147, %v144, %v146
    %v149 = vsel %vm147, %v142, %v144
    %v150 = vsel %vm147, %v140, %v142
    %v151 = vsel %vm147, %v146, %v140
    %v152 = vadd.s32 %v47, 1
    %vm153 = vcmp.ge.s32.totalorder %v152, 0
    %vm154 = vmand %vm67, %vm153
    %vm155 = vcmp.lt.s32.totalorder %v152, 16
    %vm156 = vmand %vm154, %vm155
    %v157 = vsel %vm156, 1, 0
    %v158 = vlaneseq
    %v159 = vshrl.u32 %v158, 7
    %v160 = vsub.s32 0, %v159
    %v161 = vrot.slane %v157, %v160
    %v162 = vlaneseq
    %v163 = vshrl.u32 %v162, 7
    %v164 = vsub.s32 1, %v163
    %v165 = vrot.slane %v157, %v164
    %v166 = vlaneseq
    %v167 = vshrl.u32 %v166, 7
    %v168 = vsub.s32 2, %v167
    %v169 = vrot.slane %v157, %v168
    %v170 = vlaneseq
    %v171 = vshrl.u32 %v170, 7
    %v172 = vsub.s32 3, %v171
    %v173 = vrot.slane %v157, %v172
    %vm174 = vcmp.eq.s32.totalorder %v161, 1
    %vm175 = vcmp.eq.s32.totalorder %v165, 1
    %vm176 = vcmp.eq.s32.totalorder %v169, 1
    %vm177 = vcmp.eq.s32.totalorder %v173, 1
    %v178 = vsel %vm174, %v151, 0.0
    %v179 = vsel %vm175, %v150, 0.0
    %v180 = vsel %vm176, %v149, 0.0
    %v181 = vsel %vm177, %v148, 0.0
    %182 = vrot.lane.b32.xlu0 %v42, 1
    %v183 = vpop.permute.xlu0 %182
    %184 = vrot.lane.b32.xlu0 %v43, 1
    %v185 = vpop.permute.xlu0 %184
    %186 = vrot.lane.b32.xlu0 %v44, 1
    %v187 = vpop.permute.xlu0 %186
    %188 = vrot.lane.b32.xlu0 %v45, 1
    %v189 = vpop.permute.xlu0 %188
    %vm190 = vcmp.lt.s32.totalorder %v57, 1
    %v191 = vsel %vm190, %v187, %v189
    %v192 = vsel %vm190, %v185, %v187
    %v193 = vsel %vm190, %v183, %v185
    %v194 = vsel %vm190, %v189, %v183
    %vm195 = vcmp.ge.s32.totalorder %v46, 0
    %vm196 = vcmp.lt.s32.totalorder %v46, 16
    %vm197 = vmand %vm195, %vm196
    %vm198 = vmand %vm197, %vm68
    %vm199 = vmand %vm198, %vm70
    %v200 = vsel %vm199, 1, 0
    %v201 = vlaneseq
    %v202 = vshrl.u32 %v201, 7
    %v203 = vsub.s32 0, %v202
    %v204 = vrot.slane %v200, %v203
    %v205 = vlaneseq
    %v206 = vshrl.u32 %v205, 7
    %v207 = vsub.s32 1, %v206
    %v208 = vrot.slane %v200, %v207
    %v209 = vlaneseq
    %v210 = vshrl.u32 %v209, 7
    %v211 = vsub.s32 2, %v210
    %v212 = vrot.slane %v200, %v211
    %v213 = vlaneseq
    %v214 = vshrl.u32 %v213, 7
    %v215 = vsub.s32 3, %v214
    %v216 = vrot.slane %v200, %v215
    %vm217 = vcmp.eq.s32.totalorder %v204, 1
    %vm218 = vcmp.eq.s32.totalorder %v208, 1
    %vm219 = vcmp.eq.s32.totalorder %v212, 1
    %vm220 = vcmp.eq.s32.totalorder %v216, 1
    %v221 = vsel %vm217, %v194, 0.0
    %v222 = vsel %vm218, %v193, 0.0
    %v223 = vsel %vm219, %v192, 0.0
    %v224 = vsel %vm220, %v191, 0.0
    %225 = vrot.lane.b32.xlu0 %v42, 127
    %v226 = vpop.permute.xlu0 %225
    %227 = vrot.lane.b32.xlu0 %v43, 127
    %v228 = vpop.permute.xlu0 %227
    %229 = vrot.lane.b32.xlu0 %v44, 127
    %v230 = vpop.permute.xlu0 %229
    %231 = vrot.lane.b32.xlu0 %v45, 127
    %v232 = vpop.permute.xlu0 %231
    %vm233 = vcmp.lt.s32.totalorder %v57, 127
    %v234 = vsel %vm233, %v230, %v232
    %v235 = vsel %vm233, %v228, %v230
    %v236 = vsel %vm233, %v226, %v228
    %v237 = vsel %vm233, %v232, %v226
    %vm238 = vmand %vm197, %vm153
    %vm239 = vmand %vm238, %vm155
    %v240 = vsel %vm239, 1, 0
    %v241 = vlaneseq
    %v242 = vshrl.u32 %v241, 7
    %v243 = vsub.s32 0, %v242
    %v244 = vrot.slane %v240, %v243
    %v245 = vlaneseq
    %v246 = vshrl.u32 %v245, 7
    %v247 = vsub.s32 1, %v246
    %v248 = vrot.slane %v240, %v247
    %v249 = vlaneseq
    %v250 = vshrl.u32 %v249, 7
    %v251 = vsub.s32 2, %v250
    %v252 = vrot.slane %v240, %v251
    %v253 = vlaneseq
    %v254 = vshrl.u32 %v253, 7
    %v255 = vsub.s32 3, %v254
    %v256 = vrot.slane %v240, %v255
    %vm257 = vcmp.eq.s32.totalorder %v244, 1
    %vm258 = vcmp.eq.s32.totalorder %v248, 1
    %vm259 = vcmp.eq.s32.totalorder %v252, 1
    %vm260 = vcmp.eq.s32.totalorder %v256, 1
    %v261 = vsel %vm257, %v236, 0.0
    %v262 = vsel %vm258, %v235, 0.0
    %v263 = vsel %vm259, %v234, 0.0
    %v264 = vsel %vm260, %v237, 0.0
    %265 = vrot.lane.b32.xlu0 %v42, 113
    %v266 = vpop.permute.xlu0 %265
    %267 = vrot.lane.b32.xlu0 %v43, 113
    %v268 = vpop.permute.xlu0 %267
    %269 = vrot.lane.b32.xlu0 %v44, 113
    %v270 = vpop.permute.xlu0 %269
    %271 = vrot.lane.b32.xlu0 %v45, 113
    %v272 = vpop.permute.xlu0 %271
    %vm273 = vcmp.lt.s32.totalorder %v57, 113
    %v274 = vsel %vm273, %v270, %v272
    %v275 = vsel %vm273, %v268, %v270
    %v276 = vsel %vm273, %v266, %v268
    %v277 = vsel %vm273, %v272, %v266
    %v278 = vadd.s32 %v46, 1
    %vm279 = vcmp.ge.s32.totalorder %v278, 0
    %vm280 = vcmp.lt.s32.totalorder %v278, 16
    %vm281 = vmand %vm279, %vm280
    %vm282 = vmand %vm281, %vm68
    %vm283 = vmand %vm282, %vm70
    %v284 = vsel %vm283, 1, 0
    %v285 = vlaneseq
    %v286 = vshrl.u32 %v285, 7
    %v287 = vsub.s32 0, %v286
    %v288 = vrot.slane %v284, %v287
    %v289 = vlaneseq
    %v290 = vshrl.u32 %v289, 7
    %v291 = vsub.s32 1, %v290
    %v292 = vrot.slane %v284, %v291
    %v293 = vlaneseq
    %v294 = vshrl.u32 %v293, 7
    %v295 = vsub.s32 2, %v294
    %v296 = vrot.slane %v284, %v295
    %v297 = vlaneseq
    %v298 = vshrl.u32 %v297, 7
    %v299 = vsub.s32 3, %v298
    %v300 = vrot.slane %v284, %v299
    %vm301 = vcmp.eq.s32.totalorder %v288, 1
    %vm302 = vcmp.eq.s32.totalorder %v292, 1
    %vm303 = vcmp.eq.s32.totalorder %v296, 1
    %vm304 = vcmp.eq.s32.totalorder %v300, 1
    %v305 = vsel %vm301, %v276, 0.0
    %v306 = vsel %vm302, %v275, 0.0
    %v307 = vsel %vm303, %v274, 0.0
    %v308 = vsel %vm304, %v277, 0.0
    %309 = vrot.lane.b32.xlu0 %v42, 112
    %v310 = vpop.permute.xlu0 %309
    %311 = vrot.lane.b32.xlu0 %v43, 112
    %v312 = vpop.permute.xlu0 %311
    %313 = vrot.lane.b32.xlu0 %v44, 112
    %v314 = vpop.permute.xlu0 %313
    %315 = vrot.lane.b32.xlu0 %v45, 112
    %v316 = vpop.permute.xlu0 %315
    %vm317 = vcmp.lt.s32.totalorder %v57, 112
    %v318 = vsel %vm317, %v314, %v316
    %v319 = vsel %vm317, %v312, %v314
    %v320 = vsel %vm317, %v310, %v312
    %v321 = vsel %vm317, %v316, %v310
    %vm322 = vmand %vm281, %vm110
    %vm323 = vmand %vm322, %vm112
    %v324 = vsel %vm323, 1, 0
    %v325 = vlaneseq
    %v326 = vshrl.u32 %v325, 7
    %v327 = vsub.s32 0, %v326
    %v328 = vrot.slane %v324, %v327
    %v329 = vlaneseq
    %v330 = vshrl.u32 %v329, 7
    %v331 = vsub.s32 1, %v330
    %v332 = vrot.slane %v324, %v331
    %v333 = vlaneseq
    %v334 = vshrl.u32 %v333, 7
    %v335 = vsub.s32 2, %v334
    %v336 = vrot.slane %v324, %v335
    %v337 = vlaneseq
    %v338 = vshrl.u32 %v337, 7
    %v339 = vsub.s32 3, %v338
    %v340 = vrot.slane %v324, %v339
    %vm341 = vcmp.eq.s32.totalorder %v328, 1
    %vm342 = vcmp.eq.s32.totalorder %v332, 1
    %vm343 = vcmp.eq.s32.totalorder %v336, 1
    %vm344 = vcmp.eq.s32.totalorder %v340, 1
    %v345 = vsel %vm341, %v320, 0.0
    %v346 = vsel %vm342, %v319, 0.0
    %v347 = vsel %vm343, %v318, 0.0
    %v348 = vsel %vm344, %v321, 0.0
    %349 = vrot.lane.b32.xlu0 %v42, 111
    %v350 = vpop.permute.xlu0 %349
    %351 = vrot.lane.b32.xlu0 %v43, 111
    %v352 = vpop.permute.xlu0 %351
    %353 = vrot.lane.b32.xlu0 %v44, 111
    %v354 = vpop.permute.xlu0 %353
    %355 = vrot.lane.b32.xlu0 %v45, 111
    %v356 = vpop.permute.xlu0 %355
    %vm357 = vcmp.lt.s32.totalorder %v57, 111
    %v358 = vsel %vm357, %v354, %v356
    %v359 = vsel %vm357, %v352, %v354
    %v360 = vsel %vm357, %v350, %v352
    %v361 = vsel %vm357, %v356, %v350
    %vm362 = vmand %vm281, %vm153
    %vm363 = vmand %vm362, %vm155
    %v364 = vsel %vm363, 1, 0
    %v365 = vlaneseq
    %v366 = vshrl.u32 %v365, 7
    %v367 = vsub.s32 0, %v366
    %v368 = vrot.slane %v364, %v367
    %v369 = vlaneseq
    %v370 = vshrl.u32 %v369, 7
    %v371 = vsub.s32 1, %v370
    %v372 = vrot.slane %v364, %v371
    %v373 = vlaneseq
    %v374 = vshrl.u32 %v373, 7
    %v375 = vsub.s32 2, %v374
    %v376 = vrot.slane %v364, %v375
    %v377 = vlaneseq
    %v378 = vshrl.u32 %v377, 7
    %v379 = vsub.s32 3, %v378
    %v380 = vrot.slane %v364, %v379
    %vm381 = vcmp.eq.s32.totalorder %v368, 1
    %vm382 = vcmp.eq.s32.totalorder %v372, 1
    %vm383 = vcmp.eq.s32.totalorder %v376, 1
    %vm384 = vcmp.eq.s32.totalorder %v380, 1
    %v385 = vsel %vm381, %v360, 0.0
    %v386 = vsel %vm382, %v359, 0.0
    %v387 = vsel %vm383, %v358, 0.0
    %v388 = vsel %vm384, %v361, 0.0
    %v389 = vld [vmem:[%s1] sm:$0xff]
    %v390 = vld [vmem:[%s2] sm:$0xff]
    %392 = vset.pattern.permute.xlu0 0
    %393 = vperm.xlu0 %392, %v390
    %v394 = vpop.permute.xlu0 %393
    %vm396 = vcmask 588800
    %v398 = vsel %vm396, %v389, 0
    %400 = vmatprep.subr.mxu0 0.0
    %401 = vmatpush1.msra.mxu0 0.0
    %402 = vmatprep.subr.mxu0 0.0
    %403 = vmatpush1.msra.mxu0 0.0
    %404 = vmatprep.subr.mxu0 0.0
    %405 = vmatpush1.msra.mxu0 0.0
    %406 = vmatprep.subr.mxu0 0.0
    %407 = vmatpush1.msra.mxu0 0.0
    %408 = vmatprep.subr.mxu0 0.0
    %409 = vmatpush1.msra.mxu0 0.0
    %410 = vmatprep.subr.mxu0 0.0
    %411 = vmatpush1.msra.mxu0 0.0
    %412 = vmatprep.subr.mxu0 0.0
    %413 = vmatpush1.msra.mxu0 0.0
    %414 = vmatprep.subr.mxu0 %v386
    %415 = vmatpush1.msra.mxu0 %v385
    %416 = vmatprep.subr.mxu0 %v346
    %417 = vmatpush1.msra.mxu0 %v345
    %418 = vmatprep.subr.mxu0 %v306
    %419 = vmatpush1.msra.mxu0 %v305
    %420 = vmatprep.subr.mxu0 %v262
    %421 = vmatpush1.msra.mxu0 %v261
    %422 = vmatprep.subr.mxu0 %v43
    %423 = vmatpush1.msra.mxu0 %v42
    %424 = vmatprep.subr.mxu0 %v222
    %425 = vmatpush1.msra.mxu0 %v221
    %426 = vmatprep.subr.mxu0 %v179
    %427 = vmatpush1.msra.mxu0 %v178
    %428 = vmatprep.subr.mxu0 %v136
    %429 = vmatpush1.msra.mxu0 %v135
    %430 = vmatprep.subr.mxu0 %v94
    %431 = vmatpush1.msra.mxu0 %v93
    %432 = vmatprep.subr.mxu0 0.0
    %433 = vmatpush2.msra.mxu0 0.0
    %434 = vmatprep.subr.mxu0 0.0
    %435 = vmatpush2.msra.mxu0 0.0
    %436 = vmatprep.subr.mxu0 0.0
    %437 = vmatpush2.msra.mxu0 0.0
    %438 = vmatprep.subr.mxu0 0.0
    %439 = vmatpush2.msra.mxu0 0.0
    %440 = vmatprep.subr.mxu0 0.0
    %441 = vmatpush2.msra.mxu0 0.0
    %442 = vmatprep.subr.mxu0 0.0
    %443 = vmatpush2.msra.mxu0 0.0
    %444 = vmatprep.subr.mxu0 0.0
    %445 = vmatpush2.msra.mxu0 0.0
    %446 = vmatprep.subr.mxu0 0.0
    %447 = vmatpush2.msra.mxu0 0.0
    %448 = vmatprep.subr.mxu0 0.0
    %449 = vmatpush2.msra.mxu0 0.0
    %450 = vmatprep.subr.mxu0 0.0
    %451 = vmatpush2.msra.mxu0 0.0
    %452 = vmatprep.subr.mxu0 0.0
    %453 = vmatpush2.msra.mxu0 0.0
    %454 = vmatprep.subr.mxu0 0.0
    %455 = vmatpush2.msra.mxu0 0.0
    %456 = vmatprep.subr.mxu0 0.0
    %457 = vmatpush2.msra.mxu0 0.0
    %458 = vmatprep.subr.mxu0 0.0
    %459 = vmatpush2.msra.mxu0 0.0
    %460 = vmatprep.subr.mxu0 0.0
    %461 = vmatpush2.msra.mxu0 0.0
    %462 = vmatprep.subr.mxu0 0.0
    %463 = vmatpush2.msra.mxu0 0.0
    %464 = vmatprep.mubr.f32.mxu0 0.0
    %465 = vmatmul.mubr.f32.gmra.mxu0 %v398
    %v466 = vpop.f32.mrf.mxu0
    %v467 = vadd.f32 %v394, %v466
    %v468 = vpop.f32.mrf.mxu0
    %v469 = vadd.f32 %v394, %v468
    %470 = vdwg.mxu0
    %471 = vmatprep.subr.mxu0 0.0
    %472 = vmatpush1.msra.mxu0 0.0
    %473 = vmatprep.subr.mxu0 0.0
    %474 = vmatpush1.msra.mxu0 0.0
    %475 = vmatprep.subr.mxu0 0.0
    %476 = vmatpush1.msra.mxu0 0.0
    %477 = vmatprep.subr.mxu0 0.0
    %478 = vmatpush1.msra.mxu0 0.0
    %479 = vmatprep.subr.mxu0 0.0
    %480 = vmatpush1.msra.mxu0 0.0
    %481 = vmatprep.subr.mxu0 0.0
    %482 = vmatpush1.msra.mxu0 0.0
    %483 = vmatprep.subr.mxu0 0.0
    %484 = vmatpush1.msra.mxu0 0.0
    %485 = vmatprep.subr.mxu0 %v388
    %486 = vmatpush1.msra.mxu0 %v387
    %487 = vmatprep.subr.mxu0 %v348
    %488 = vmatpush1.msra.mxu0 %v347
    %489 = vmatprep.subr.mxu0 %v308
    %490 = vmatpush1.msra.mxu0 %v307
    %491 = vmatprep.subr.mxu0 %v264
    %492 = vmatpush1.msra.mxu0 %v263
    %493 = vmatprep.subr.mxu0 %v45
    %494 = vmatpush1.msra.mxu0 %v44
    %495 = vmatprep.subr.mxu0 %v224
    %496 = vmatpush1.msra.mxu0 %v223
    %497 = vmatprep.subr.mxu0 %v181
    %498 = vmatpush1.msra.mxu0 %v180
    %499 = vmatprep.subr.mxu0 %v138
    %500 = vmatpush1.msra.mxu0 %v137
    %501 = vmatprep.subr.mxu0 %v96
    %502 = vmatpush1.msra.mxu0 %v95
    %503 = vmatprep.subr.mxu0 0.0
    %504 = vmatpush2.msra.mxu0 0.0
    %505 = vmatprep.subr.mxu0 0.0
    %506 = vmatpush2.msra.mxu0 0.0
    %507 = vmatprep.subr.mxu0 0.0
    %508 = vmatpush2.msra.mxu0 0.0
    %509 = vmatprep.subr.mxu0 0.0
    %510 = vmatpush2.msra.mxu0 0.0
    %511 = vmatprep.subr.mxu0 0.0
    %512 = vmatpush2.msra.mxu0 0.0
    %513 = vmatprep.subr.mxu0 0.0
    %514 = vmatpush2.msra.mxu0 0.0
    %515 = vmatprep.subr.mxu0 0.0
    %516 = vmatpush2.msra.mxu0 0.0
    %517 = vmatprep.subr.mxu0 0.0
    %518 = vmatpush2.msra.mxu0 0.0
    %519 = vmatprep.subr.mxu0 0.0
    %520 = vmatpush2.msra.mxu0 0.0
    %521 = vmatprep.subr.mxu0 0.0
    %522 = vmatpush2.msra.mxu0 0.0
    %523 = vmatprep.subr.mxu0 0.0
    %524 = vmatpush2.msra.mxu0 0.0
    %525 = vmatprep.subr.mxu0 0.0
    %526 = vmatpush2.msra.mxu0 0.0
    %527 = vmatprep.subr.mxu0 0.0
    %528 = vmatpush2.msra.mxu0 0.0
    %529 = vmatprep.subr.mxu0 0.0
    %530 = vmatpush2.msra.mxu0 0.0
    %531 = vmatprep.subr.mxu0 0.0
    %532 = vmatpush2.msra.mxu0 0.0
    %533 = vmatprep.subr.mxu0 0.0
    %534 = vmatpush2.msra.mxu0 0.0
    %535 = vmatprep.mubr.f32.mxu0 0.0
    %536 = vmatmul.mubr.f32.gmra.mxu0 %v398
    %v537 = vpop.f32.mrf.mxu0
    %v538 = vadd.f32 %v394, %v537
    %v539 = vpop.f32.mrf.mxu0
    %v540 = vadd.f32 %v394, %v539
    %541 = vdwg.mxu0
    %v542 = vmax.f32 %v467, 0.0
    %v543 = vmax.f32 %v469, 0.0
    %v544 = vmax.f32 %v538, 0.0
    %v545 = vmax.f32 %v540, 0.0
    %546 = vrot.lane.b32.xlu0 %v542, 17
    %v547 = vpop.permute.xlu0 %546
    %548 = vrot.lane.b32.xlu0 %v543, 17
    %v549 = vpop.permute.xlu0 %548
    %550 = vrot.lane.b32.xlu0 %v544, 17
    %v551 = vpop.permute.xlu0 %550
    %552 = vrot.lane.b32.xlu0 %v545, 17
    %v553 = vpop.permute.xlu0 %552
    %v554 = vsel %vm58, %v551, %v553
    %v555 = vsel %vm58, %v549, %v551
    %v556 = vsel %vm58, %v547, %v549
    %v557 = vsel %vm58, %v553, %v547
    %v558 = vsel %vm89, %v557, 0.0
    %v559 = vsel %vm90, %v556, 0.0
    %v560 = vsel %vm91, %v555, 0.0
    %v561 = vsel %vm92, %v554, 0.0
    %562 = vrot.lane.b32.xlu0 %v542, 16
    %v563 = vpop.permute.xlu0 %562
    %564 = vrot.lane.b32.xlu0 %v543, 16
    %v565 = vpop.permute.xlu0 %564
    %566 = vrot.lane.b32.xlu0 %v544, 16
    %v567 = vpop.permute.xlu0 %566
    %568 = vrot.lane.b32.xlu0 %v545, 16
    %v569 = vpop.permute.xlu0 %568
    %v570 = vsel %vm105, %v567, %v569
    %v571 = vsel %vm105, %v565, %v567
    %v572 = vsel %vm105, %v563, %v565
    %v573 = vsel %vm105, %v569, %v563
    %v574 = vsel %vm131, %v573, 0.0
    %v575 = vsel %vm132, %v572, 0.0
    %v576 = vsel %vm133, %v571, 0.0
    %v577 = vsel %vm134, %v570, 0.0
    %578 = vrot.lane.b32.xlu0 %v542, 15
    %v579 = vpop.permute.xlu0 %578
    %580 = vrot.lane.b32.xlu0 %v543, 15
    %v581 = vpop.permute.xlu0 %580
    %582 = vrot.lane.b32.xlu0 %v544, 15
    %v583 = vpop.permute.xlu0 %582
    %584 = vrot.lane.b32.xlu0 %v545, 15
    %v585 = vpop.permute.xlu0 %584
    %v586 = vsel %vm147, %v583, %v585
    %v587 = vsel %vm147, %v581, %v583
    %v588 = vsel %vm147, %v579, %v581
    %v589 = vsel %vm147, %v585, %v579
    %v590 = vsel %vm174, %v589, 0.0
    %v591 = vsel %vm175, %v588, 0.0
    %v592 = vsel %vm176, %v587, 0.0
    %v593 = vsel %vm177, %v586, 0.0
    %594 = vrot.lane.b32.xlu0 %v542, 1
    %v595 = vpop.permute.xlu0 %594
    %596 = vrot.lane.b32.xlu0 %v543, 1
    %v597 = vpop.permute.xlu0 %596
    %598 = vrot.lane.b32.xlu0 %v544, 1
    %v599 = vpop.permute.xlu0 %598
    %600 = vrot.lane.b32.xlu0 %v545, 1
    %v601 = vpop.permute.xlu0 %600
    %v602 = vsel %vm190, %v599, %v601
    %v603 = vsel %vm190, %v597, %v599
    %v604 = vsel %vm190, %v595, %v597
    %v605 = vsel %vm190, %v601, %v595
    %v606 = vsel %vm217, %v605, 0.0
    %v607 = vsel %vm218, %v604, 0.0
    %v608 = vsel %vm219, %v603, 0.0
    %v609 = vsel %vm220, %v602, 0.0
    %610 = vrot.lane.b32.xlu0 %v542, 127
    %v611 = vpop.permute.xlu0 %610
    %612 = vrot.lane.b32.xlu0 %v543, 127
    %v613 = vpop.permute.xlu0 %612
    %614 = vrot.lane.b32.xlu0 %v544, 127
    %v615 = vpop.permute.xlu0 %614
    %616 = vrot.lane.b32.xlu0 %v545, 127
    %v617 = vpop.permute.xlu0 %616
    %v618 = vsel %vm233, %v615, %v617
    %v619 = vsel %vm233, %v613, %v615
    %v620 = vsel %vm233, %v611, %v613
    %v621 = vsel %vm233, %v617, %v611
    %v622 = vsel %vm257, %v620, 0.0
    %v623 = vsel %vm258, %v619, 0.0
    %v624 = vsel %vm259, %v618, 0.0
    %v625 = vsel %vm260, %v621, 0.0
    %626 = vrot.lane.b32.xlu0 %v542, 113
    %v627 = vpop.permute.xlu0 %626
    %628 = vrot.lane.b32.xlu0 %v543, 113
    %v629 = vpop.permute.xlu0 %628
    %630 = vrot.lane.b32.xlu0 %v544, 113
    %v631 = vpop.permute.xlu0 %630
    %632 = vrot.lane.b32.xlu0 %v545, 113
    %v633 = vpop.permute.xlu0 %632
    %v634 = vsel %vm273, %v631, %v633
    %v635 = vsel %vm273, %v629, %v631
    %v636 = vsel %vm273, %v627, %v629
    %v637 = vsel %vm273, %v633, %v627
    %v638 = vsel %vm301, %v636, 0.0
    %v639 = vsel %vm302, %v635, 0.0
    %v640 = vsel %vm303, %v634, 0.0
    %v641 = vsel %vm304, %v637, 0.0
    %642 = vrot.lane.b32.xlu0 %v542, 112
    %v643 = vpop.permute.xlu0 %642
    %644 = vrot.lane.b32.xlu0 %v543, 112
    %v645 = vpop.permute.xlu0 %644
    %646 = vrot.lane.b32.xlu0 %v544, 112
    %v647 = vpop.permute.xlu0 %646
    %648 = vrot.lane.b32.xlu0 %v545, 112
    %v649 = vpop.permute.xlu0 %648
    %v650 = vsel %vm317, %v647, %v649
    %v651 = vsel %vm317, %v645, %v647
    %v652 = vsel %vm317, %v643, %v645
    %v653 = vsel %vm317, %v649, %v643
    %v654 = vsel %vm341, %v652, 0.0
    %v655 = vsel %vm342, %v651, 0.0
    %v656 = vsel %vm343, %v650, 0.0
    %v657 = vsel %vm344, %v653, 0.0
    %658 = vrot.lane.b32.xlu0 %v542, 111
    %v659 = vpop.permute.xlu0 %658
    %660 = vrot.lane.b32.xlu0 %v543, 111
    %v661 = vpop.permute.xlu0 %660
    %662 = vrot.lane.b32.xlu0 %v544, 111
    %v663 = vpop.permute.xlu0 %662
    %664 = vrot.lane.b32.xlu0 %v545, 111
    %v665 = vpop.permute.xlu0 %664
    %v666 = vsel %vm357, %v663, %v665
    %v667 = vsel %vm357, %v661, %v663
    %v668 = vsel %vm357, %v659, %v661
    %v669 = vsel %vm357, %v665, %v659
    %v670 = vsel %vm381, %v668, 0.0
    %v671 = vsel %vm382, %v667, 0.0
    %v672 = vsel %vm383, %v666, 0.0
    %v673 = vsel %vm384, %v669, 0.0
    %v674 = vld [vmem:[%s3] sm:$0xf]
    %v676 = vsel %vm396, %v674, 0
    %678 = vmatprep.subr.mxu0 0.0
    %679 = vmatpush1.msra.mxu0 0.0
    %680 = vmatprep.subr.mxu0 0.0
    %681 = vmatpush1.msra.mxu0 0.0
    %682 = vmatprep.subr.mxu0 0.0
    %683 = vmatpush1.msra.mxu0 0.0
    %684 = vmatprep.subr.mxu0 0.0
    %685 = vmatpush1.msra.mxu0 0.0
    %686 = vmatprep.subr.mxu0 0.0
    %687 = vmatpush1.msra.mxu0 0.0
    %688 = vmatprep.subr.mxu0 0.0
    %689 = vmatpush1.msra.mxu0 0.0
    %690 = vmatprep.subr.mxu0 0.0
    %691 = vmatpush1.msra.mxu0 0.0
    %692 = vmatprep.subr.mxu0 %v671
    %693 = vmatpush1.msra.mxu0 %v670
    %694 = vmatprep.subr.mxu0 %v655
    %695 = vmatpush1.msra.mxu0 %v654
    %696 = vmatprep.subr.mxu0 %v639
    %697 = vmatpush1.msra.mxu0 %v638
    %698 = vmatprep.subr.mxu0 %v623
    %699 = vmatpush1.msra.mxu0 %v622
    %700 = vmatprep.subr.mxu0 %v543
    %701 = vmatpush1.msra.mxu0 %v542
    %702 = vmatprep.subr.mxu0 %v607
    %703 = vmatpush1.msra.mxu0 %v606
    %704 = vmatprep.subr.mxu0 %v591
    %705 = vmatpush1.msra.mxu0 %v590
    %706 = vmatprep.subr.mxu0 %v575
    %707 = vmatpush1.msra.mxu0 %v574
    %708 = vmatprep.subr.mxu0 %v559
    %709 = vmatpush1.msra.mxu0 %v558
    %710 = vmatprep.subr.mxu0 0.0
    %711 = vmatpush2.msra.mxu0 0.0
    %712 = vmatprep.subr.mxu0 0.0
    %713 = vmatpush2.msra.mxu0 0.0
    %714 = vmatprep.subr.mxu0 0.0
    %715 = vmatpush2.msra.mxu0 0.0
    %716 = vmatprep.subr.mxu0 0.0
    %717 = vmatpush2.msra.mxu0 0.0
    %718 = vmatprep.subr.mxu0 0.0
    %719 = vmatpush2.msra.mxu0 0.0
    %720 = vmatprep.subr.mxu0 0.0
    %721 = vmatpush2.msra.mxu0 0.0
    %722 = vmatprep.subr.mxu0 0.0
    %723 = vmatpush2.msra.mxu0 0.0
    %724 = vmatprep.subr.mxu0 0.0
    %725 = vmatpush2.msra.mxu0 0.0
    %726 = vmatprep.subr.mxu0 0.0
    %727 = vmatpush2.msra.mxu0 0.0
    %728 = vmatprep.subr.mxu0 0.0
    %729 = vmatpush2.msra.mxu0 0.0
    %730 = vmatprep.subr.mxu0 0.0
    %731 = vmatpush2.msra.mxu0 0.0
    %732 = vmatprep.subr.mxu0 0.0
    %733 = vmatpush2.msra.mxu0 0.0
    %734 = vmatprep.subr.mxu0 0.0
    %735 = vmatpush2.msra.mxu0 0.0
    %736 = vmatprep.subr.mxu0 0.0
    %737 = vmatpush2.msra.mxu0 0.0
    %738 = vmatprep.subr.mxu0 0.0
    %739 = vmatpush2.msra.mxu0 0.0
    %740 = vmatprep.subr.mxu0 0.0
    %741 = vmatpush2.msra.mxu0 0.0
    %742 = vmatprep.mubr.f32.mxu0 0.0
    %743 = vmatmul.mubr.f32.gmra.mxu0 %v676
    %v744 = vpop.f32.mrf.mxu0
    %v745 = vadd.f32 0.0, %v744
    %v746 = vpop.f32.mrf.mxu0
    %v747 = vadd.f32 0.0, %v746
    %748 = vdwg.mxu0
    %749 = vmatprep.subr.mxu0 0.0
    %750 = vmatpush1.msra.mxu0 0.0
    %751 = vmatprep.subr.mxu0 0.0
    %752 = vmatpush1.msra.mxu0 0.0
    %753 = vmatprep.subr.mxu0 0.0
    %754 = vmatpush1.msra.mxu0 0.0
    %755 = vmatprep.subr.mxu0 0.0
    %756 = vmatpush1.msra.mxu0 0.0
    %757 = vmatprep.subr.mxu0 0.0
    %758 = vmatpush1.msra.mxu0 0.0
    %759 = vmatprep.subr.mxu0 0.0
    %760 = vmatpush1.msra.mxu0 0.0
    %761 = vmatprep.subr.mxu0 0.0
    %762 = vmatpush1.msra.mxu0 0.0
    %763 = vmatprep.subr.mxu0 %v673
    %764 = vmatpush1.msra.mxu0 %v672
    %765 = vmatprep.subr.mxu0 %v657
    %766 = vmatpush1.msra.mxu0 %v656
    %767 = vmatprep.subr.mxu0 %v641
    %768 = vmatpush1.msra.mxu0 %v640
    %769 = vmatprep.subr.mxu0 %v625
    %770 = vmatpush1.msra.mxu0 %v624
    %771 = vmatprep.subr.mxu0 %v545
    %772 = vmatpush1.msra.mxu0 %v544
    %773 = vmatprep.subr.mxu0 %v609
    %774 = vmatpush1.msra.mxu0 %v608
    %775 = vmatprep.subr.mxu0 %v593
    %776 = vmatpush1.msra.mxu0 %v592
    %777 = vmatprep.subr.mxu0 %v577
    %778 = vmatpush1.msra.mxu0 %v576
    %779 = vmatprep.subr.mxu0 %v561
    %780 = vmatpush1.msra.mxu0 %v560
    %781 = vmatprep.subr.mxu0 0.0
    %782 = vmatpush2.msra.mxu0 0.0
    %783 = vmatprep.subr.mxu0 0.0
    %784 = vmatpush2.msra.mxu0 0.0
    %785 = vmatprep.subr.mxu0 0.0
    %786 = vmatpush2.msra.mxu0 0.0
    %787 = vmatprep.subr.mxu0 0.0
    %788 = vmatpush2.msra.mxu0 0.0
    %789 = vmatprep.subr.mxu0 0.0
    %790 = vmatpush2.msra.mxu0 0.0
    %791 = vmatprep.subr.mxu0 0.0
    %792 = vmatpush2.msra.mxu0 0.0
    %793 = vmatprep.subr.mxu0 0.0
    %794 = vmatpush2.msra.mxu0 0.0
    %795 = vmatprep.subr.mxu0 0.0
    %796 = vmatpush2.msra.mxu0 0.0
    %797 = vmatprep.subr.mxu0 0.0
    %798 = vmatpush2.msra.mxu0 0.0
    %799 = vmatprep.subr.mxu0 0.0
    %800 = vmatpush2.msra.mxu0 0.0
    %801 = vmatprep.subr.mxu0 0.0
    %802 = vmatpush2.msra.mxu0 0.0
    %803 = vmatprep.subr.mxu0 0.0
    %804 = vmatpush2.msra.mxu0 0.0
    %805 = vmatprep.subr.mxu0 0.0
    %806 = vmatpush2.msra.mxu0 0.0
    %807 = vmatprep.subr.mxu0 0.0
    %808 = vmatpush2.msra.mxu0 0.0
    %809 = vmatprep.subr.mxu0 0.0
    %810 = vmatpush2.msra.mxu0 0.0
    %811 = vmatprep.subr.mxu0 0.0
    %812 = vmatpush2.msra.mxu0 0.0
    %813 = vmatprep.mubr.f32.mxu0 0.0
    %814 = vmatmul.mubr.f32.gmra.mxu0 %v676
    %v815 = vpop.f32.mrf.mxu0
    %v816 = vadd.f32 0.0, %v815
    %v817 = vpop.f32.mrf.mxu0
    %v818 = vadd.f32 0.0, %v817
    %819 = vdwg.mxu0
    %vm820 = vcmask 1043456
    %v821 = vsel %vm820, %v745, 0.0
    %v822 = vsel %vm820, %v747, 0.0
    %v823 = vadd.f32 %v821, %v822
    %v824 = vsel %vm820, %v816, 0.0
    %v825 = vadd.f32 %v823, %v824
    %v826 = vsel %vm820, %v818, 0.0
    %v827 = vadd.f32 %v825, %v826
    %828 = vadd.xlane.f32.xlu0 %v827
    %v829 = vpop.xlane.xlu0 %828
    %v830 = vmul.f32 %v745, %v745
    %v831 = vmul.f32 %v747, %v747
    %v832 = vmul.f32 %v816, %v816
    %v833 = vmul.f32 %v818, %v818
    %v834 = vsel %vm820, %v830, 0.0
    %v835 = vsel %vm820, %v831, 0.0
    %v836 = vadd.f32 %v834, %v835
    %v837 = vsel %vm820, %v832, 0.0
    %v838 = vadd.f32 %v836, %v837
    %v839 = vsel %vm820, %v833, 0.0
    %v840 = vadd.f32 %v838, %v839
    %841 = vadd.xlane.f32.xlu0 %v840
    %v842 = vpop.xlane.xlu0 %841
    %v843 = vmul.f32 %v829, 0.001953125
    %v844 = vmul.f32 %v842, 0.001953125
    %v845 = vmul.f32 %v843, %v843
    %v846 = vsub.f32 %v844, %v845
    %v847 = vadd.f32 %v846, 1e-05
    %v848 = vrsqrt.pop %v847
    %v849 = vld [vmem:[%s4] sm:$0xf]
    %v850 = vmul.f32 %v848, %v849
    %v851 = vsub.f32 %v745, %v843
    %v852 = vsub.f32 %v747, %v843
    %v853 = vsub.f32 %v816, %v843
    %v854 = vsub.f32 %v818, %v843
    %856 = vset.pattern.permute.xlu0 0
    %857 = vperm.xlu0 %856, %v850
    %v858 = vpop.permute.xlu0 %857
    %v860 = vmul.f32 %v851, %v858
    %v861 = vmul.f32 %v852, %v858
    %v862 = vmul.f32 %v853, %v858
    %v863 = vmul.f32 %v854, %v858
    %v864 = vld [vmem:[%s5] sm:$0xf]
    %866 = vset.pattern.permute.xlu0 0
    %867 = vperm.xlu0 %866, %v864
    %v868 = vpop.permute.xlu0 %867
    %v870 = vadd.f32 %v860, %v868
    %v871 = vadd.f32 %v861, %v868
    %v872 = vadd.f32 %v862, %v868
    %v873 = vadd.f32 %v863, %v868
    %v874 = vadd.f32 %v870, %v42
    %v875 = vadd.f32 %v871, %v43
    %v876 = vadd.f32 %v872, %v44
    %v877 = vadd.f32 %v873, %v45
    %v882 = vcombine.low %v874, %v875
    %v883 = vcombine.low %v876, %v877
    %886 = vst [vmem:[#allocation5] sm:$0xff] %v882
    %887 = vst [vmem:[#allocation5 + $0x8] sm:$0xff] %v883
    // Predicated region
    $region38: #{tpu_custom_call.1} parent=1 // pred_check
      _
    $region39: #{tpu_custom_call.1} parent=1 // pred_check_branch
      %889 = sbr.rel (0) target = $region41
    $region40: #{tpu_custom_call.1} parent=1 // pred_region
      %s891 = ssub.s32 256, 256
      %892 = vsyncadd [#allocation4], %s891
      %s894 = sshll.u32 [#allocation5], 4
      %s895 = int_to_ptr.vmem [resolvable:$true] %s894
      %897 = dma.vmem_to_hbm [thread:$0]  %s895, 256, %s8, [#allocation4]
    $region41: #{tpu_custom_call.1} parent=1 // pred_fallthru
      _
    // Predicated region
    $region42: #{tpu_custom_call.1} parent=1 // pred_check
      _
    $region43: #{tpu_custom_call.1} parent=1 // pred_check_branch
      %899 = sbr.rel (0) target = $region45
    $region44: #{tpu_custom_call.1} parent=1 // pred_region
      %900 = dma.done [#allocation4], 256
    $region45: #{tpu_custom_call.1} parent=1 // pred_fallthru
      _
    %901 = vsyncpa [#allocation3], 1
    %902 = vsyncpa [#allocation4], 1

</llo_original>
